<compile_context>
chip_gen: v7x
topology: tpu7x:2x2x1
jax: 0.10.0
libtpu: 0.0.40
codegen_flags: <defaults>
</compile_context>

<pallas_src>
import functools
from functools import partial

import jax
import jax.numpy as jnp
from jax.experimental import pallas as pl
from jax.experimental.pallas import tpu as pltpu


# ---------------------------------------------------------------------------
# helpers
# ---------------------------------------------------------------------------

def _pow2ceil(n: int) -> int:
    n = max(int(n), 1)
    return 1 << (n - 1).bit_length()


def _snake_f32(x32, alpha, recip):
    # Snake activation, computed in f32 (bf16 would underflow the 1e-9 term).
    # TODO(synk): if the bundle shows VALU as the binding slot on v6e/v7x,
    # compute the sin/square part in bf16 and keep only the combine in f32.
    return x32 + recip * jnp.square(jnp.sin(alpha * x32))


@functools.lru_cache(maxsize=1)
def _vmem_limit_bytes() -> int:
    # v5e/v6e: 128 MiB physical VMEM -> ~96 MiB scoped; v7x: 64 MiB -> ~48 MiB.
    try:
        cap = int(pltpu.get_tpu_info().vmem_capacity_bytes)
    except Exception:
        cap = 64 * 1024 * 1024
    return min((cap * 3) // 4, 96 * 1024 * 1024)


# ---------------------------------------------------------------------------
# fused Pallas kernel: [Snake] -> K-tap dilated causal conv -> [Snake -> 1x1]
#                      -> [+ residual]
# ---------------------------------------------------------------------------

def _fused_unit_kernel(*refs, K, dilation, halo, H, T_TILE,
                       pre_snake, post_unit, residual, tap_fuse):
    """One (batch, time-tile) block.

    refs (in order):
      halo_ref (H, C_in)      : last H input rows of the previous time tile
      cur_ref  (T_TILE, C_in) : current time tile of the input
      [a_pre, r_pre (1, C_in)]        if pre_snake
      w1 (K, C_in, C1)  or (K*C_in, C1) if tap_fuse
      b1 (1, C1)
      [a_mid, r_mid (1, C1), w2 (C1, C2), b2 (1, C2)]  if post_unit
      o_ref (T_TILE, C_out)
      win_ref (H + T_TILE, C_in) compute-dtype VMEM scratch (snake(x) window)
      [cat_ref (T_TILE, K*C_in) compute-dtype VMEM scratch]  if tap_fuse
    """
    it = iter(refs)
    halo_ref = next(it)
    cur_ref = next(it)
    if pre_snake:
        a_pre_ref = next(it)
        r_pre_ref = next(it)
    w1_ref = next(it)
    b1_ref = next(it)
    if post_unit:
        a_mid_ref = next(it)
        r_mid_ref = next(it)
        w2_ref = next(it)
        b2_ref = next(it)
    o_ref = next(it)
    win_ref = next(it)
    cat_ref = next(it) if tap_fuse else None

    t = pl.program_id(1)
    cdt = win_ref.dtype                  # compute dtype for MXU inputs (bf16)
    c_in = cur_ref.shape[1]

    # ---- prologue: build snake(x) window [halo rows | current tile] ----
    # Snake math is f32; the window is stored directly in compute dtype since
    # every tap is cast to bf16 before the MXU anyway (perf-review item 1).
    if pre_snake:
        a_pre = a_pre_ref[...].astype(jnp.float32)
        r_pre = r_pre_ref[...].astype(jnp.float32)
        h_cur = _snake_f32(cur_ref[...].astype(jnp.float32),
                           a_pre, r_pre).astype(cdt)
    else:
        h_cur = cur_ref[...].astype(cdt)
    win_ref[pl.ds(H, T_TILE), :] = h_cur

    @pl.when(t == 0)
    def _zero_halo():                    # causal left padding
        win_ref[pl.ds(0, H), :] = jnp.zeros((H, c_in), cdt)

    @pl.when(t > 0)
    def _load_halo():
        hv32 = halo_ref[...].astype(jnp.float32)
        if pre_snake:
            hv32 = _snake_f32(hv32, a_pre, r_pre)
        win_ref[pl.ds(0, H), :] = hv32.astype(cdt)

    # ---- dilated K-tap causal conv, f32 accumulation ----
    # NOTE: tap offsets base + k*dilation are sublane-unaligned; on deep
    # layers this is hidden under MXU time (perf-review item 9).
    base = H - halo
    if tap_fuse:
        # Pack the K shifted windows lane-adjacent and run ONE MXU matmul
        # (fills the 256-deep v6e/v7x MXU for C_in <= 128, avoids K-1 f32
        # VPU accumulate adds; on v7x accumulation stays in the MRB).
        for k in range(K):
            off = base + k * dilation            # static python int
            src = h_cur if off == H else win_ref[pl.ds(off, T_TILE), :]
            cat_ref[:, k * c_in:(k + 1) * c_in] = src
        acc = jnp.dot(cat_ref[...], w1_ref[...],
                      preferred_element_type=jnp.float32)
    else:
        acc = jnp.zeros((T_TILE, w1_ref.shape[-1]), jnp.float32)
        for k in range(K):                       # small static tap count
            off = base + k * dilation
            xk = h_cur if off == H else win_ref[pl.ds(off, T_TILE), :]
            acc = acc + jnp.dot(xk, w1_ref[k],
                                preferred_element_type=jnp.float32)
    acc = acc + b1_ref[...].astype(jnp.float32)

    # ---- optional epilogue: Snake -> 1x1 conv ----
    if post_unit:
        a_mid = a_mid_ref[...].astype(jnp.float32)
        r_mid = r_mid_ref[...].astype(jnp.float32)
        acc = _snake_f32(acc, a_mid, r_mid)
        acc = jnp.dot(acc.astype(cdt), w2_ref[...],
                      preferred_element_type=jnp.float32)
        acc = acc + b2_ref[...].astype(jnp.float32)

    if residual:
        # Re-read the VMEM-resident pre-snake input tile here instead of
        # keeping an f32 copy alive across all matmuls (perf-review item 2).
        acc = acc + cur_ref[...].astype(jnp.float32)

    o_ref[...] = acc.astype(o_ref.dtype)


def _fused_layer_pallas(x, w1, b1, *, dilation, alpha_pre, recip_pre,
                        alpha_mid, recip_mid, w2, b2, residual,
                        t_tile, compute_dtype, tap_fuse_opt,
                        even_time_tiles):
    """x: (N, T, C_in) NTC. Returns (N, T, C_out) in compute_dtype."""
    N, T, C_in = x.shape
    K, _, C1 = w1.shape
    post = w2 is not None
    C_out = w2.shape[1] if post else C1
    if residual:
        assert C_out == C_in

    halo = (K - 1) * dilation
    assert halo >= 1
    H = max(16, _pow2ceil(halo))                       # halo block (sublanes)
    tt = max(H, min(_pow2ceil(t_tile), _pow2ceil(T)))  # time tile, pow2, H|tt
    pre = alpha_pre is not None
    # Tap-concat fusion helps when the contraction is shallower than the MXU.
    tap_fuse = bool(tap_fuse_opt) and C_in <= 128 and K >= 2

    # ---- per-stage VMEM budget audit: shrink tt until it fits ----
    vmem_limit = _vmem_limit_bytes()
    bpe = jnp.dtype(compute_dtype).itemsize

    def _step_bytes(tt_):
        act = 2 * (tt_ * C_in + H * C_in + tt_ * C_out) * bpe   # dbl-buffered
        scratch = (H + tt_) * C_in * bpe
        if tap_fuse:
            scratch += tt_ * K * C_in * bpe
        wts = 2 * (K * C_in * C1 + (C1 * C_out if post else 0)) * bpe
        small = 8 * (C_in + 2 * C1 + C_out) * 4
        return act + scratch + wts + small

    while tt > H and _step_bytes(tt) > int(0.6 * vmem_limit):
        tt //= 2

    n_t = -(-T // tt)
    if even_time_tiles and N == 1 and n_t > 1 and n_t % 2 == 1:
        n_t += 1                                   # v7x 2-TC load balance
    T_pad = n_t * tt

    x = x.astype(compute_dtype)
    if T_pad != T:
        # right-pad only: causal layers never read ahead, padded rows trimmed
        x = jnp.pad(x, ((0, 0), (0, T_pad - T), (0, 0)))
    hb = tt // H                                    # halo blocks per tile

    in_specs = [
        # halo = last H rows of the previous tile (same array, tiny block);
        # clamped / masked to zeros inside the kernel at t == 0.
        pl.BlockSpec((None, H, C_in),
                     lambda n, t: (n, jnp.maximum(t * hb - 1, 0), 0)),
        # current tile (weights below keep constant block index -> resident)
        pl.BlockSpec((None, tt, C_in), lambda n, t: (n, t, 0)),
    ]
    args = [x, x]
    if pre:
        in_specs += [pl.BlockSpec((1, C_in), lambda n, t: (0, 0)),
                     pl.BlockSpec((1, C_in), lambda n, t: (0, 0))]
        args += [alpha_pre.reshape(1, C_in).astype(jnp.float32),
                 recip_pre.reshape(1, C_in).astype(jnp.float32)]
    if tap_fuse:
        in_specs += [pl.BlockSpec((K * C_in, C1), lambda n, t: (0, 0))]
        args += [w1.reshape(K * C_in, C1).astype(compute_dtype)]
    else:
        in_specs += [pl.BlockSpec((K, C_in, C1), lambda n, t: (0, 0, 0))]
        args += [w1.astype(compute_dtype)]
    in_specs += [pl.BlockSpec((1, C1), lambda n, t: (0, 0))]
    args += [b1.reshape(1, C1).astype(jnp.float32)]
    if post:
        in_specs += [pl.BlockSpec((1, C1), lambda n, t: (0, 0)),
                     pl.BlockSpec((1, C1), lambda n, t: (0, 0)),
                     pl.BlockSpec((C1, C_out), lambda n, t: (0, 0)),
                     pl.BlockSpec((1, C_out), lambda n, t: (0, 0))]
        args += [alpha_mid.reshape(1, C1).astype(jnp.float32),
                 recip_mid.reshape(1, C1).astype(jnp.float32),
                 w2.astype(compute_dtype),
                 b2.reshape(1, C_out).astype(jnp.float32)]

    scratch_shapes = [pltpu.VMEM((H + tt, C_in), compute_dtype)]
    if tap_fuse:
        scratch_shapes += [pltpu.VMEM((tt, K * C_in), compute_dtype)]

    kernel = partial(_fused_unit_kernel, K=K, dilation=dilation, halo=halo,
                     H=H, T_TILE=tt, pre_snake=pre, post_unit=post,
                     residual=residual, tap_fuse=tap_fuse)

    # TODO(synk): for production C_out < 128 stages, either fall back to XLA
    # (min_pallas_channels=128) or emit a lane-dense output slab to avoid
    # masked vst.msk partial stores.
    # TODO(synk): optionally try pipeline_mode=pl.Buffered(3) on the cur-tile
    # spec for the early mem-bound stages (weights stay default-buffered).
    out = pl.pallas_call(
        kernel,
        out_shape=jax.ShapeDtypeStruct((N, T_pad, C_out), compute_dtype),
        grid=(N, n_t),
        in_specs=in_specs,
        out_specs=pl.BlockSpec((None, tt, C_out), lambda n, t: (n, t, 0)),
        scratch_shapes=scratch_shapes,
        compiler_params=pltpu.CompilerParams(
            dimension_semantics=("parallel", "parallel"),
            vmem_limit_bytes=vmem_limit),
    )(*args)

    if T_pad != T:
        out = out[:, :T, :]
    return out


# ---------------------------------------------------------------------------
# plain-XLA path: reference for correctness AND fallback for tiny-channel
# layers (same bf16-storage / f32-accumulation flow as the kernel)
# ---------------------------------------------------------------------------

def _fused_layer_ref(x, w1, b1, *, dilation, alpha_pre, recip_pre,
                     alpha_mid, recip_mid, w2, b2, residual, compute_dtype):
    N, T, C_in = x.shape
    K = w1.shape[0]
    halo = (K - 1) * dilation
    x = x.astype(compute_dtype)

    h = x.astype(jnp.float32)
    if alpha_pre is not None:
        h = _snake_f32(h, alpha_pre[None, None, :], recip_pre[None, None, :])
    h = h.astype(compute_dtype)
    hp = jnp.pad(h, ((0, 0), (halo, 0), (0, 0)))       # causal left pad

    w1c = w1.astype(compute_dtype)
    acc = jnp.zeros((N, T, w1.shape[2]), jnp.float32)
    for k in range(K):
        acc = acc + jnp.einsum(
            "ntc,cd->ntd", hp[:, k * dilation:k * dilation + T, :], w1c[k],
            preferred_element_type=jnp.float32)
    acc = acc + b1[None, None, :].astype(jnp.float32)

    if w2 is not None:
        acc = _snake_f32(acc, alpha_mid[None, None, :],
                         recip_mid[None, None, :])
        acc = jnp.einsum("ntc,cd->ntd", acc.astype(compute_dtype),
                         w2.astype(compute_dtype),
                         preferred_element_type=jnp.float32)
        acc = acc + b2[None, None, :].astype(jnp.float32)
    if residual:
        acc = acc + x.astype(jnp.float32)
    return acc.astype(compute_dtype)


# ---------------------------------------------------------------------------
# layer dispatch
# ---------------------------------------------------------------------------

def _fused_layer(x, w1, b1, *, dilation=1, alpha_pre=None, alpha_mid=None,
                 w2=None, b2=None, residual=False, use_pallas=True,
                 min_pallas_channels=8, t_tile=1024,
                 compute_dtype=jnp.bfloat16, tap_fuse=True,
                 even_time_tiles=False):
    C_in = x.shape[-1]
    C_out = w2.shape[1] if w2 is not None else w1.shape[2]
    recip_pre = None if alpha_pre is None else \
        1.0 / (alpha_pre.astype(jnp.float32) + 1e-9)
    recip_mid = None if alpha_mid is None else \
        1.0 / (alpha_mid.astype(jnp.float32) + 1e-9)
    kwargs = dict(dilation=dilation, alpha_pre=alpha_pre, recip_pre=recip_pre,
                  alpha_mid=alpha_mid, recip_mid=recip_mid, w2=w2, b2=b2,
                  residual=residual, compute_dtype=compute_dtype)
    if use_pallas and min(C_in, C_out) >= min_pallas_channels:
        return _fused_layer_pallas(x, w1, b1, t_tile=t_tile,
                                   tap_fuse_opt=tap_fuse,
                                   even_time_tiles=even_time_tiles, **kwargs)
    # Tiny-channel layers (input data_size->capacity conv, final latent conv):
    # lanes would be mostly padding / masked stores -> plain XLA is better.
    # (Production: use min_pallas_channels=128.)
    return _fused_layer_ref(x, w1, b1, **kwargs)


# ---------------------------------------------------------------------------
# parameter construction (mirrors EncoderV2.__init__, identity normalization)
# ---------------------------------------------------------------------------

def init_encoder_params(key, *, data_size, capacity, ratios, latent_size,
                        n_out, kernel_size, dilations):
    dilations_list = [dilations for _ in ratios]   # normalize_dilations (ints)
    keys = iter(jax.random.split(key, 64))

    def conv_init(k_, c_in, c_out, ksz):
        wk, bk = jax.random.split(k_)
        scale = 1.0 / jnp.sqrt(jnp.float32(c_in * ksz))
        # NOTE: real PyTorch Conv1d weights are (C_out, C_in, K); transpose to
        # (K, C_in, C_out) when loading checkpoints (no kernel flip: Conv1d is
        # cross-correlation).
        w = jax.random.normal(wk, (ksz, c_in, c_out), jnp.float32) * scale
        b = jax.random.normal(bk, (c_out,), jnp.float32) * 0.01
        return w, b

    def snake_alpha(k_, dim):
        # torch init is ones; randomized here so the per-channel alpha /
        # reciprocal handling is exercised non-trivially by the test.
        return 1.0 + 0.25 * jax.random.normal(k_, (dim,), jnp.float32)

    layers = []
    k0 = 2 * kernel_size + 1
    w, b = conv_init(next(keys), data_size, capacity, k0)
    layers.append(dict(type="conv", w=w, b=b))          # no pre-snake

    num_channels = capacity
    for r, dils in zip(ratios, dilations_list):
        for d in dils:
            w1, b1 = conv_init(next(keys), num_channels, num_channels,
                               kernel_size)
            w2, b2 = conv_init(next(keys), num_channels, num_channels, 1)
            layers.append(dict(type="res_unit", dilation=d,
                               alpha1=snake_alpha(next(keys), num_channels),
                               w1=w1, b1=b1,
                               alpha2=snake_alpha(next(keys), num_channels),
                               w2=w2[0], b2=b2))
        out_channels = num_channels * 2                  # keep_dim=False
        alpha = snake_alpha(next(keys), num_channels)
        w, b = conv_init(next(keys), num_channels, out_channels, 2 * r)
        layers.append(dict(type="down", r=r, alpha=alpha, w=w, b=b))
        num_channels = out_channels

    alpha = snake_alpha(next(keys), num_channels)
    w, b = conv_init(next(keys), num_channels, latent_size * n_out,
                     kernel_size)
    layers.append(dict(type="conv", w=w, b=b, alpha=alpha))  # Snake fused in
    return layers


# ---------------------------------------------------------------------------
# forward pass
# ---------------------------------------------------------------------------

def encoder_v2_forward(x_nct, layers, *, use_pallas=True, t_tile=1024,
                       compute_dtype=jnp.bfloat16, min_pallas_channels=8,
                       tap_fuse=True, even_time_tiles=False):
    common = dict(use_pallas=use_pallas, t_tile=t_tile,
                  compute_dtype=compute_dtype,
                  min_pallas_channels=min_pallas_channels,
                  tap_fuse=tap_fuse, even_time_tiles=even_time_tiles)
    x = jnp.transpose(x_nct, (0, 2, 1)).astype(compute_dtype)   # NCT -> NTC
    for lyr in layers:
        kind = lyr["type"]
        if kind == "conv":
            x = _fused_layer(x, lyr["w"], lyr["b"], dilation=1,
                             alpha_pre=lyr.get("alpha"), **common)
        elif kind == "res_unit":
            x = _fused_layer(x, lyr["w1"], lyr["b1"],
                             dilation=lyr["dilation"],
                             alpha_pre=lyr["alpha1"], alpha_mid=lyr["alpha2"],
                             w2=lyr["w2"], b2=lyr["b2"], residual=True,
                             **common)
        elif kind == "down":
            # Snake + (kernel 2r, stride r, causal pad r) conv as polyphase
            # frames: (N, T, C) -> (N, T/r, r*C), 2-tap causal conv.
            r = lyr["r"]
            N, T, C = x.shape
            T_trim = (T // r) * r            # explicit trim if r does not | T
            x = x[:, :T_trim, :]
            xf = x.reshape(N, T_trim // r, r * C)
            wf = lyr["w"].reshape(2, r * C, lyr["w"].shape[2])
            alpha_f = jnp.tile(lyr["alpha"], r)   # snake commutes with framing
            x = _fused_layer(xf, wf, lyr["b"], dilation=1, alpha_pre=alpha_f,
                             **common)
        else:
            raise ValueError(kind)
    return jnp.transpose(x, (0, 2, 1)).astype(jnp.float32)      # NTC -> NCT


# ---------------------------------------------------------------------------

if __name__ == "__main__":
    key = jax.random.PRNGKey(0)
    pkey, xkey = jax.random.split(key)

    cfg = dict(
        data_size=2,
        capacity=8,
        ratios=(2, 2),
        latent_size=4,
        n_out=1,
        kernel_size=3,
        dilations=(1, 3),
    )
    batch, time = 2, 64

    layers = init_encoder_params(pkey, **cfg)

    # PyTorch-style NCT input
    x = jax.random.normal(xkey, (batch, cfg["data_size"], time), jnp.float32)

    # t_tile=16 at these tiny shapes so the time-tiled grid + halo path is
    # actually exercised (production default is 1024; the per-stage VMEM
    # budget audit shrinks it automatically on v7x's 64 MiB VMEM).
    y = encoder_v2_forward(x, layers, use_pallas=True, t_tile=16)
    y = jax.block_until_ready(y)

    # plain-XLA reference with the same bf16-storage / f32-accumulation flow
    y_ref = encoder_v2_forward(x, layers, use_pallas=False)

    downsample = 1
    for r in cfg["ratios"]:
        downsample *= r
    expected_shape = (batch, cfg["latent_size"] * cfg["n_out"],
                      time // downsample)
    assert y.shape == expected_shape, (y.shape, expected_shape)

    err = float(jnp.max(jnp.abs(y - y_ref)))
    assert jnp.allclose(y, y_ref, atol=2e-2, rtol=2e-2), err

    print("KERNEL_OK")
</pallas_src>

<mosaic_0001>
module attributes {stable_mosaic.version = 11 : i64} {
  func.func @_fused_unit_kernel(%arg0: i32, %arg1: i32, %arg2: memref<1x16x8xbf16, #tpu.memory_space<vmem>>, %arg3: memref<1x16x8xbf16, #tpu.memory_space<vmem>>, %arg4: memref<1x8xf32, #tpu.memory_space<vmem>>, %arg5: memref<1x8xf32, #tpu.memory_space<vmem>>, %arg6: memref<24x8xbf16, #tpu.memory_space<vmem>>, %arg7: memref<1x8xf32, #tpu.memory_space<vmem>>, %arg8: memref<1x8xf32, #tpu.memory_space<vmem>>, %arg9: memref<1x8xf32, #tpu.memory_space<vmem>>, %arg10: memref<8x8xbf16, #tpu.memory_space<vmem>>, %arg11: memref<1x8xf32, #tpu.memory_space<vmem>>, %arg12: memref<1x16x8xbf16, #tpu.memory_space<vmem>>, %arg13: memref<32x8xbf16, #tpu.memory_space<vmem>>, %arg14: memref<16x24xbf16, #tpu.memory_space<vmem>>) attributes {dimension_semantics = [#tpu.dimension_semantics<parallel>, #tpu.dimension_semantics<parallel>], iteration_bounds = array<i64: 2, 4>, scalar_prefetch = 0 : i64, scratch_operands = 2 : i64, tpu.core_type = #tpu.core_type<tc>, window_params = [{transform_indices = @transform_0, window_bounds = array<i64: 1, 16, 8>}, {transform_indices = @transform_1, window_bounds = array<i64: 1, 16, 8>}, {pipeline_mode = #tpu.pipeline_mode<synchronous>, transform_indices = @transform_2, window_bounds = array<i64: 1, 8>}, {pipeline_mode = #tpu.pipeline_mode<synchronous>, transform_indices = @transform_3, window_bounds = array<i64: 1, 8>}, {pipeline_mode = #tpu.pipeline_mode<synchronous>, transform_indices = @transform_4, window_bounds = array<i64: 24, 8>}, {pipeline_mode = #tpu.pipeline_mode<synchronous>, transform_indices = @transform_5, window_bounds = array<i64: 1, 8>}, {pipeline_mode = #tpu.pipeline_mode<synchronous>, transform_indices = @transform_6, window_bounds = array<i64: 1, 8>}, {pipeline_mode = #tpu.pipeline_mode<synchronous>, transform_indices = @transform_7, window_bounds = array<i64: 1, 8>}, {pipeline_mode = #tpu.pipeline_mode<synchronous>, transform_indices = @transform_8, window_bounds = array<i64: 8, 8>}, {pipeline_mode = #tpu.pipeline_mode<synchronous>, transform_indices = @transform_9, window_bounds = array<i64: 1, 8>}, {transform_indices = @transform_10, window_bounds = array<i64: 1, 16, 8>}]} {
    %c0 = arith.constant 0 : index
    %c0_0 = arith.constant 0 : index
    %0 = vector.load %arg4[%c0, %c0_0] : memref<1x8xf32, #tpu.memory_space<vmem>>, vector<1x8xf32>
    %c0_1 = arith.constant 0 : index
    %c0_2 = arith.constant 0 : index
    %1 = vector.load %arg5[%c0_1, %c0_2] : memref<1x8xf32, #tpu.memory_space<vmem>>, vector<1x8xf32>
    %c0_3 = arith.constant 0 : index
    %c0_4 = arith.constant 0 : index
    %c0_5 = arith.constant 0 : index
    %2 = vector.load %arg3[%c0_3, %c0_4, %c0_5] : memref<1x16x8xbf16, #tpu.memory_space<vmem>>, vector<1x16x8xbf16>
    %3 = vector.shape_cast %2 : vector<1x16x8xbf16> to vector<16x8xbf16>
    %4 = arith.extf %3 : vector<16x8xbf16> to vector<16x8xf32>
    %5 = vector.broadcast %0 : vector<1x8xf32> to vector<16x8xf32>
    %6 = arith.mulf %5, %4 : vector<16x8xf32>
    %7 = math.sin %6 : vector<16x8xf32>
    %8 = arith.mulf %7, %7 : vector<16x8xf32>
    %9 = vector.broadcast %1 : vector<1x8xf32> to vector<16x8xf32>
    %10 = arith.mulf %9, %8 : vector<16x8xf32>
    %11 = arith.addf %4, %10 : vector<16x8xf32>
    %12 = arith.truncf %11 : vector<16x8xf32> to vector<16x8xbf16>
    %c16 = arith.constant 16 : index
    %c0_6 = arith.constant 0 : index
    %13 = vector.load %arg13[%c16, %c0_6] : memref<32x8xbf16, #tpu.memory_space<vmem>>, vector<16x8xbf16>
    tpu.vector_store %arg13[%c16, %c0_6], %12 {strides = array<i32>} : memref<32x8xbf16, #tpu.memory_space<vmem>>, vector<16x8xbf16>,
    %c0_i32 = arith.constant 0 : i32
    %14 = arith.cmpi eq, %arg1, %c0_i32 : i32
    %15 = arith.extui %14 : i1 to i32
    %c0_i32_7 = arith.constant 0 : i32
    %16 = arith.cmpi ne, %15, %c0_i32_7 : i32
    scf.if %16 {
      %cst_38 = arith.constant 0.000000e+00 : bf16
      %54 = vector.broadcast %cst_38 : bf16 to vector<16x8xbf16>
      %c0_39 = arith.constant 0 : index
      %c0_40 = arith.constant 0 : index
      %55 = vector.load %arg13[%c0_39, %c0_40] : memref<32x8xbf16, #tpu.memory_space<vmem>>, vector<16x8xbf16>
      tpu.vector_store %arg13[%c0_39, %c0_40], %54 {strides = array<i32>} : memref<32x8xbf16, #tpu.memory_space<vmem>>, vector<16x8xbf16>,
    } else {
    }
    %c0_i32_8 = arith.constant 0 : i32
    %17 = arith.cmpi sgt, %arg1, %c0_i32_8 : i32
    %18 = arith.extui %17 : i1 to i32
    %c0_i32_9 = arith.constant 0 : i32
    %19 = arith.cmpi ne, %18, %c0_i32_9 : i32
    scf.if %19 {
      %c0_38 = arith.constant 0 : index
      %c0_39 = arith.constant 0 : index
      %c0_40 = arith.constant 0 : index
      %54 = vector.load %arg2[%c0_38, %c0_39, %c0_40] : memref<1x16x8xbf16, #tpu.memory_space<vmem>>, vector<1x16x8xbf16>
      %55 = vector.shape_cast %54 : vector<1x16x8xbf16> to vector<16x8xbf16>
      %56 = arith.extf %55 : vector<16x8xbf16> to vector<16x8xf32>
      %57 = vector.broadcast %0 : vector<1x8xf32> to vector<16x8xf32>
      %58 = arith.mulf %57, %56 : vector<16x8xf32>
      %59 = math.sin %58 : vector<16x8xf32>
      %60 = arith.mulf %59, %59 : vector<16x8xf32>
      %61 = vector.broadcast %1 : vector<1x8xf32> to vector<16x8xf32>
      %62 = arith.mulf %61, %60 : vector<16x8xf32>
      %63 = arith.addf %56, %62 : vector<16x8xf32>
      %64 = arith.truncf %63 : vector<16x8xf32> to vector<16x8xbf16>
      %c0_41 = arith.constant 0 : index
      %c0_42 = arith.constant 0 : index
      %65 = vector.load %arg13[%c0_41, %c0_42] : memref<32x8xbf16, #tpu.memory_space<vmem>>, vector<16x8xbf16>
      tpu.vector_store %arg13[%c0_41, %c0_42], %64 {strides = array<i32>} : memref<32x8xbf16, #tpu.memory_space<vmem>>, vector<16x8xbf16>,
    } else {
    }
    %c14 = arith.constant 14 : index
    %c0_10 = arith.constant 0 : index
    %20 = vector.load %arg13[%c14, %c0_10] : memref<32x8xbf16, #tpu.memory_space<vmem>>, vector<16x8xbf16>
    %c0_11 = arith.constant 0 : index
    %c0_12 = arith.constant 0 : index
    %21 = vector.load %arg14[%c0_11, %c0_12] : memref<16x24xbf16, #tpu.memory_space<vmem>>, vector<16x8xbf16>
    tpu.vector_store %arg14[%c0_11, %c0_12], %20 {strides = array<i32>} : memref<16x24xbf16, #tpu.memory_space<vmem>>, vector<16x8xbf16>,
    %c15 = arith.constant 15 : index
    %c0_13 = arith.constant 0 : index
    %22 = vector.load %arg13[%c15, %c0_13] : memref<32x8xbf16, #tpu.memory_space<vmem>>, vector<16x8xbf16>
    %c0_14 = arith.constant 0 : index
    %c8 = arith.constant 8 : index
    %23 = vector.load %arg14[%c0_14, %c8] : memref<16x24xbf16, #tpu.memory_space<vmem>>, vector<16x8xbf16>
    tpu.vector_store %arg14[%c0_14, %c8], %22 {strides = array<i32>} : memref<16x24xbf16, #tpu.memory_space<vmem>>, vector<16x8xbf16>,
    %c0_15 = arith.constant 0 : index
    %c16_16 = arith.constant 16 : index
    %24 = vector.load %arg14[%c0_15, %c16_16] : memref<16x24xbf16, #tpu.memory_space<vmem>>, vector<16x8xbf16>
    tpu.vector_store %arg14[%c0_15, %c16_16], %12 {strides = array<i32>} : memref<16x24xbf16, #tpu.memory_space<vmem>>, vector<16x8xbf16>,
    %c0_17 = arith.constant 0 : index
    %c0_18 = arith.constant 0 : index
    %25 = vector.load %arg14[%c0_17, %c0_18] : memref<16x24xbf16, #tpu.memory_space<vmem>>, vector<16x24xbf16>
    %c0_19 = arith.constant 0 : index
    %c0_20 = arith.constant 0 : index
    %26 = vector.load %arg6[%c0_19, %c0_20] : memref<24x8xbf16, #tpu.memory_space<vmem>>, vector<24x8xbf16>
    %cst = arith.constant dense<0.000000e+00> : vector<16x8xf32>
    %27 = tpu.matmul %25, %26, %cst {dimension_numbers = #tpu.dot_dimension_numbers<[1], [0], [0], [1], [0, 0, 1, 1], [], []>} : vector<16x24xbf16>, vector<24x8xbf16>, vector<16x8xf32> -> vector<16x8xf32>
    %c0_21 = arith.constant 0 : index
    %c0_22 = arith.constant 0 : index
    %28 = vector.load %arg7[%c0_21, %c0_22] : memref<1x8xf32, #tpu.memory_space<vmem>>, vector<1x8xf32>
    %29 = vector.broadcast %28 : vector<1x8xf32> to vector<16x8xf32>
    %30 = arith.addf %27, %29 : vector<16x8xf32>
    %c0_23 = arith.constant 0 : index
    %c0_24 = arith.constant 0 : index
    %31 = vector.load %arg8[%c0_23, %c0_24] : memref<1x8xf32, #tpu.memory_space<vmem>>, vector<1x8xf32>
    %c0_25 = arith.constant 0 : index
    %c0_26 = arith.constant 0 : index
    %32 = vector.load %arg9[%c0_25, %c0_26] : memref<1x8xf32, #tpu.memory_space<vmem>>, vector<1x8xf32>
    %33 = vector.broadcast %31 : vector<1x8xf32> to vector<16x8xf32>
    %34 = arith.mulf %33, %30 : vector<16x8xf32>
    %35 = math.sin %34 : vector<16x8xf32>
    %36 = arith.mulf %35, %35 : vector<16x8xf32>
    %37 = vector.broadcast %32 : vector<1x8xf32> to vector<16x8xf32>
    %38 = arith.mulf %37, %36 : vector<16x8xf32>
    %39 = arith.addf %30, %38 : vector<16x8xf32>
    %40 = arith.truncf %39 : vector<16x8xf32> to vector<16x8xbf16>
    %c0_27 = arith.constant 0 : index
    %c0_28 = arith.constant 0 : index
    %41 = vector.load %arg10[%c0_27, %c0_28] : memref<8x8xbf16, #tpu.memory_space<vmem>>, vector<8x8xbf16>
    %cst_29 = arith.constant dense<0.000000e+00> : vector<16x8xf32>
    %42 = tpu.matmul %40, %41, %cst_29 {dimension_numbers = #tpu.dot_dimension_numbers<[1], [0], [0], [1], [0, 0, 1, 1], [], []>} : vector<16x8xbf16>, vector<8x8xbf16>, vector<16x8xf32> -> vector<16x8xf32>
    %c0_30 = arith.constant 0 : index
    %c0_31 = arith.constant 0 : index
    %43 = vector.load %arg11[%c0_30, %c0_31] : memref<1x8xf32, #tpu.memory_space<vmem>>, vector<1x8xf32>
    %44 = vector.broadcast %43 : vector<1x8xf32> to vector<16x8xf32>
    %45 = arith.addf %42, %44 : vector<16x8xf32>
    %c0_32 = arith.constant 0 : index
    %c0_33 = arith.constant 0 : index
    %c0_34 = arith.constant 0 : index
    %46 = vector.load %arg3[%c0_32, %c0_33, %c0_34] : memref<1x16x8xbf16, #tpu.memory_space<vmem>>, vector<1x16x8xbf16>
    %47 = vector.shape_cast %46 : vector<1x16x8xbf16> to vector<16x8xbf16>
    %48 = arith.extf %47 : vector<16x8xbf16> to vector<16x8xf32>
    %49 = arith.addf %45, %48 : vector<16x8xf32>
    %50 = arith.truncf %49 : vector<16x8xf32> to vector<16x8xbf16>
    %c0_35 = arith.constant 0 : index
    %c0_36 = arith.constant 0 : index
    %c0_37 = arith.constant 0 : index
    %51 = vector.load %arg12[%c0_35, %c0_36, %c0_37] : memref<1x16x8xbf16, #tpu.memory_space<vmem>>, vector<1x16x8xbf16>
    %52 = vector.shape_cast %51 : vector<1x16x8xbf16> to vector<16x8xbf16>
    %53 = vector.shape_cast %50 : vector<16x8xbf16> to vector<1x16x8xbf16>
    tpu.vector_store %arg12[%c0_35, %c0_36, %c0_37], %53 {strides = array<i32>} : memref<1x16x8xbf16, #tpu.memory_space<vmem>>, vector<1x16x8xbf16>,
    return
  }
  func.func @transform_0(%arg0: i32, %arg1: i32) -> (i32, i32, i32) {
    %c1_i32 = arith.constant 1 : i32
    %0 = arith.muli %arg1, %c1_i32 : i32
    %c1_i32_0 = arith.constant 1 : i32
    %1 = arith.subi %0, %c1_i32_0 : i32
    %c0_i32 = arith.constant 0 : i32
    %2 = arith.maxsi %1, %c0_i32 : i32
    %c0_i32_1 = arith.constant 0 : i32
    %c0_i32_2 = arith.constant 0 : i32
    return %arg0, %2, %c0_i32_1 : i32, i32, i32
  }
  func.func @transform_1(%arg0: i32, %arg1: i32) -> (i32, i32, i32) {
    %c0_i32 = arith.constant 0 : i32
    %c0_i32_0 = arith.constant 0 : i32
    return %arg0, %arg1, %c0_i32 : i32, i32, i32
  }
  func.func @transform_2(%arg0: i32, %arg1: i32) -> (i32, i32) {
    %c0_i32 = arith.constant 0 : i32
    %c0_i32_0 = arith.constant 0 : i32
    %c0_i32_1 = arith.constant 0 : i32
    return %c0_i32, %c0_i32_0 : i32, i32
  }
  func.func @transform_3(%arg0: i32, %arg1: i32) -> (i32, i32) {
    %c0_i32 = arith.constant 0 : i32
    %c0_i32_0 = arith.constant 0 : i32
    %c0_i32_1 = arith.constant 0 : i32
    return %c0_i32, %c0_i32_0 : i32, i32
  }
  func.func @transform_4(%arg0: i32, %arg1: i32) -> (i32, i32) {
    %c0_i32 = arith.constant 0 : i32
    %c0_i32_0 = arith.constant 0 : i32
    %c0_i32_1 = arith.constant 0 : i32
    return %c0_i32, %c0_i32_0 : i32, i32
  }
  func.func @transform_5(%arg0: i32, %arg1: i32) -> (i32, i32) {
    %c0_i32 = arith.constant 0 : i32
    %c0_i32_0 = arith.constant 0 : i32
    %c0_i32_1 = arith.constant 0 : i32
    return %c0_i32, %c0_i32_0 : i32, i32
  }
  func.func @transform_6(%arg0: i32, %arg1: i32) -> (i32, i32) {
    %c0_i32 = arith.constant 0 : i32
    %c0_i32_0 = arith.constant 0 : i32
    %c0_i32_1 = arith.constant 0 : i32
    return %c0_i32, %c0_i32_0 : i32, i32
  }
  func.func @transform_7(%arg0: i32, %arg1: i32) -> (i32, i32) {
    %c0_i32 = arith.constant 0 : i32
    %c0_i32_0 = arith.constant 0 : i32
    %c0_i32_1 = arith.constant 0 : i32
    return %c0_i32, %c0_i32_0 : i32, i32
  }
  func.func @transform_8(%arg0: i32, %arg1: i32) -> (i32, i32) {
    %c0_i32 = arith.constant 0 : i32
    %c0_i32_0 = arith.constant 0 : i32
    %c0_i32_1 = arith.constant 0 : i32
    return %c0_i32, %c0_i32_0 : i32, i32
  }
  func.func @transform_9(%arg0: i32, %arg1: i32) -> (i32, i32) {
    %c0_i32 = arith.constant 0 : i32
    %c0_i32_0 = arith.constant 0 : i32
    %c0_i32_1 = arith.constant 0 : i32
    return %c0_i32, %c0_i32_0 : i32, i32
  }
  func.func @transform_10(%arg0: i32, %arg1: i32) -> (i32, i32, i32) {
    %c0_i32 = arith.constant 0 : i32
    %c0_i32_0 = arith.constant 0 : i32
    return %arg0, %arg1, %c0_i32 : i32, i32, i32
  }
}

</mosaic_0001>

<llo_original>
// kernel: tpu_custom_call.1
$region0: #{tpu_custom_call.1}
  #allocation0 [shape = 'u32[]', space=smem, size = 0x4, offset = 0x4, fixed_abs, tag = 'smem constant byte address 0x4 - core index']
  #allocation1 [shape = 'u32[144,128]{1,0:T(1,128)}', space=vmem, size = 0x12000, scoped, tag = 'internal scratch']
  #allocation2 [shape = 'bf16[32,8]{1,0:T(16,128)(2,1)}', space=vmem, size = 0x2000, scoped, tag = 'scratch operand']
  #allocation3 [shape = 'bf16[16,24]{1,0:T(16,128)(2,1)}', space=vmem, size = 0x1000, scoped, tag = 'scratch operand']
  %s0 = inlined_call_operand.vmem [shape: bf16[2,64,8], index: 0, kind: input, shape index: {}]
  %s1 = inlined_call_operand.vmem [shape: bf16[2,64,8], index: 1, kind: input, shape index: {}]
  %s2 = inlined_call_operand.vmem [shape: f32[1,8], index: 2, kind: input, shape index: {}]
  %s3 = inlined_call_operand.vmem [shape: f32[1,8], index: 3, kind: input, shape index: {}]
  %s4 = inlined_call_operand.vmem [shape: bf16[24,8], index: 4, kind: input, shape index: {}]
  %s5 = inlined_call_operand.vmem [shape: f32[1,8], index: 5, kind: input, shape index: {}]
  %s6 = inlined_call_operand.vmem [shape: f32[1,8], index: 6, kind: input, shape index: {}]
  %s7 = inlined_call_operand.vmem [shape: f32[1,8], index: 7, kind: input, shape index: {}]
  %s8 = inlined_call_operand.vmem [shape: bf16[8,8], index: 8, kind: input, shape index: {}]
  %s9 = inlined_call_operand.vmem [shape: f32[1,8], index: 9, kind: input, shape index: {}]
  %s10 = inlined_call_operand.vmem [shape: bf16[2,64,8], index: 10, kind: output, shape index: {}]
  %s11 = sld [smem:[#allocation0]]
  $region81: #{tpu_custom_call.1} parent=0
    _
  %s13 = ssub.s32 1, %s11
  %s14 = scalar_select 0, %s13, %s11
  loop: start=0, step=1, limit=10
  $region2: #{tpu_custom_call.1} parent=0 // loop_pre_header
    _
  $region3: #{tpu_custom_call.1} parent=0 // loop_header
    %s16 = sphi 0, %s20
    %p17 = scmp.ge.s32.totalorder %s16, 10
    %s23 = sphi 0, %s35
    %s24 = sphi 0, %s31
    %s25 = sphi 0, %s23
    %s26 = sphi 0, %s24
    %s27 = sphi 0, %s25
    %s28 = sphi 0, %s26
    %s46 = sphi 0, %s48
    %s49 = sphi 0, %s46
    %s50 = sphi 0, %s49
    %s66 = sphi 0, %s50
    %s74 = sphi 0, %s76
    %s77 = sphi 0, %s74
    %s78 = sphi 0, %s77
    %s94 = sphi 0, %s78
    %s98 = sphi 0, %s98
    %s100 = sphi 0, %s98
    %s101 = sphi 0, %s100
    %s115 = sphi 0, %s101
    %s119 = sphi 0, %s119
    %s121 = sphi 0, %s119
    %s122 = sphi 0, %s121
    %s136 = sphi 0, %s122
    %s140 = sphi 0, %s140
    %s142 = sphi 0, %s140
    %s143 = sphi 0, %s142
    %s157 = sphi 0, %s143
    %s161 = sphi 0, %s161
    %s163 = sphi 0, %s161
    %s164 = sphi 0, %s163
    %s178 = sphi 0, %s164
    %s182 = sphi 0, %s182
    %s184 = sphi 0, %s182
    %s185 = sphi 0, %s184
    %s199 = sphi 0, %s185
    %s203 = sphi 0, %s203
    %s205 = sphi 0, %s203
    %s206 = sphi 0, %s205
    %s220 = sphi 0, %s206
    %s224 = sphi 0, %s224
    %s226 = sphi 0, %s224
    %s227 = sphi 0, %s226
    %s241 = sphi 0, %s227
    %s245 = sphi 0, %s245
    %s247 = sphi 0, %s245
    %s248 = sphi 0, %s247
    %s262 = sphi 0, %s248
    %s270 = sphi 0, %s272
    %s273 = sphi 0, %s270
    %s274 = sphi 0, %s273
    %s290 = sphi 0, %s274
  $region4: #{tpu_custom_call.1} parent=0 // loop_header_branch
    %19 = sbr.rel (%p17) target = $region8
  $region5: #{tpu_custom_call.1} parent=0 // loop_body
    %s21 = ssub.s32 %s16, 1
    %s22 = ssub.s32 %s16, 2
    %s29 = sadd.s32 1, %s24
    %p30 = scmp.ge.s32.totalorder %s29, 4
    %s31 = scalar_select %p30, 0, %s29
    %s32 = sadd.s32 1, %s23
    %s33 = scalar_select %p30, %s32, %s23
    %p34 = scmp.ge.s32.totalorder %s33, 2
    %s35 = scalar_select %p34, 0, %s33
    %s36 = ssub.s32 %s24, 1
    %p37 = scmp.gt.s32.totalorder %s36, 0
    %s38 = scalar_select %p37, %s36, 0
    %s39 = ssub.s32 %s31, 1
    %p40 = scmp.gt.s32.totalorder %s39, 0
    %s41 = scalar_select %p40, %s39, 0
    %s42 = ssub.s32 %s23, %s35
    %s43 = ssub.s32 %s38, %s41
    %s44 = sor.u32 %s42, %s43
    %p45 = scmp.eq.s32.totalorder %s44, 0
    %s47 = sadd.s32 %s46, 1
    %s48 = scalar_select %p45, %s46, %s47
    %p51 = pneg %p45
    %p52 = scmp.eq.s32.totalorder %s16, 7
    %p53 = por %p51, %p52
    %p54 = scmp.ne.s32.totalorder %s46, %s49
    %p55 = scmp.eq.s32.totalorder %s16, 0
    %p56 = por %p54, %p55
    %p57 = scmp.ne.s32.totalorder %s46, %s49
    %p58 = scmp.eq.s32.totalorder %s21, 7
    %p59 = por %p57, %p58
    %p60 = scmp.ne.s32.totalorder %s49, %s50
    %p61 = scmp.eq.s32.totalorder %s21, 0
    %p62 = por %p60, %p61
    %p63 = scmp.ne.s32.totalorder %s49, %s50
    %p64 = scmp.eq.s32.totalorder %s22, 7
    %p65 = por %p63, %p64
    %p67 = scmp.ne.s32.totalorder %s50, %s66
    %p68 = scmp.eq.s32.totalorder %s22, 0
    %p69 = por %p67, %p68
    %s70 = ssub.s32 %s23, %s35
    %s71 = ssub.s32 %s24, %s31
    %s72 = sor.u32 %s70, %s71
    %p73 = scmp.eq.s32.totalorder %s72, 0
    %s75 = sadd.s32 %s74, 1
    %s76 = scalar_select %p73, %s74, %s75
    %p79 = pneg %p73
    %p80 = scmp.eq.s32.totalorder %s16, 7
    %p81 = por %p79, %p80
    %p82 = scmp.ne.s32.totalorder %s74, %s77
    %p83 = scmp.eq.s32.totalorder %s16, 0
    %p84 = por %p82, %p83
    %p85 = scmp.ne.s32.totalorder %s74, %s77
    %p86 = scmp.eq.s32.totalorder %s21, 7
    %p87 = por %p85, %p86
    %p88 = scmp.ne.s32.totalorder %s77, %s78
    %p89 = scmp.eq.s32.totalorder %s21, 0
    %p90 = por %p88, %p89
    %p91 = scmp.ne.s32.totalorder %s77, %s78
    %p92 = scmp.eq.s32.totalorder %s22, 7
    %p93 = por %p91, %p92
    %p95 = scmp.ne.s32.totalorder %s78, %s94
    %p96 = scmp.eq.s32.totalorder %s22, 0
    %p97 = por %p95, %p96
    %s99 = sadd.s32 %s98, 1
    %p102 = scmp.eq.s32.totalorder %s16, 7
    %p103 = scmp.ne.s32.totalorder %s98, %s100
    %p104 = scmp.eq.s32.totalorder %s16, 0
    %p105 = por %p103, %p104
    %p106 = scmp.ne.s32.totalorder %s98, %s100
    %p107 = scmp.eq.s32.totalorder %s21, 7
    %p108 = por %p106, %p107
    %p109 = scmp.ne.s32.totalorder %s100, %s101
    %p110 = scmp.eq.s32.totalorder %s21, 0
    %p111 = por %p109, %p110
    %p112 = scmp.ne.s32.totalorder %s100, %s101
    %p113 = scmp.eq.s32.totalorder %s22, 7
    %p114 = por %p112, %p113
    %p116 = scmp.ne.s32.totalorder %s101, %s115
    %p117 = scmp.eq.s32.totalorder %s22, 0
    %p118 = por %p116, %p117
    %s120 = sadd.s32 %s119, 1
    %p123 = scmp.eq.s32.totalorder %s16, 7
    %p124 = scmp.ne.s32.totalorder %s119, %s121
    %p125 = scmp.eq.s32.totalorder %s16, 0
    %p126 = por %p124, %p125
    %p127 = scmp.ne.s32.totalorder %s119, %s121
    %p128 = scmp.eq.s32.totalorder %s21, 7
    %p129 = por %p127, %p128
    %p130 = scmp.ne.s32.totalorder %s121, %s122
    %p131 = scmp.eq.s32.totalorder %s21, 0
    %p132 = por %p130, %p131
    %p133 = scmp.ne.s32.totalorder %s121, %s122
    %p134 = scmp.eq.s32.totalorder %s22, 7
    %p135 = por %p133, %p134
    %p137 = scmp.ne.s32.totalorder %s122, %s136
    %p138 = scmp.eq.s32.totalorder %s22, 0
    %p139 = por %p137, %p138
    %s141 = sadd.s32 %s140, 1
    %p144 = scmp.eq.s32.totalorder %s16, 7
    %p145 = scmp.ne.s32.totalorder %s140, %s142
    %p146 = scmp.eq.s32.totalorder %s16, 0
    %p147 = por %p145, %p146
    %p148 = scmp.ne.s32.totalorder %s140, %s142
    %p149 = scmp.eq.s32.totalorder %s21, 7
    %p150 = por %p148, %p149
    %p151 = scmp.ne.s32.totalorder %s142, %s143
    %p152 = scmp.eq.s32.totalorder %s21, 0
    %p153 = por %p151, %p152
    %p154 = scmp.ne.s32.totalorder %s142, %s143
    %p155 = scmp.eq.s32.totalorder %s22, 7
    %p156 = por %p154, %p155
    %p158 = scmp.ne.s32.totalorder %s143, %s157
    %p159 = scmp.eq.s32.totalorder %s22, 0
    %p160 = por %p158, %p159
    %s162 = sadd.s32 %s161, 1
    %p165 = scmp.eq.s32.totalorder %s16, 7
    %p166 = scmp.ne.s32.totalorder %s161, %s163
    %p167 = scmp.eq.s32.totalorder %s16, 0
    %p168 = por %p166, %p167
    %p169 = scmp.ne.s32.totalorder %s161, %s163
    %p170 = scmp.eq.s32.totalorder %s21, 7
    %p171 = por %p169, %p170
    %p172 = scmp.ne.s32.totalorder %s163, %s164
    %p173 = scmp.eq.s32.totalorder %s21, 0
    %p174 = por %p172, %p173
    %p175 = scmp.ne.s32.totalorder %s163, %s164
    %p176 = scmp.eq.s32.totalorder %s22, 7
    %p177 = por %p175, %p176
    %p179 = scmp.ne.s32.totalorder %s164, %s178
    %p180 = scmp.eq.s32.totalorder %s22, 0
    %p181 = por %p179, %p180
    %s183 = sadd.s32 %s182, 1
    %p186 = scmp.eq.s32.totalorder %s16, 7
    %p187 = scmp.ne.s32.totalorder %s182, %s184
    %p188 = scmp.eq.s32.totalorder %s16, 0
    %p189 = por %p187, %p188
    %p190 = scmp.ne.s32.totalorder %s182, %s184
    %p191 = scmp.eq.s32.totalorder %s21, 7
    %p192 = por %p190, %p191
    %p193 = scmp.ne.s32.totalorder %s184, %s185
    %p194 = scmp.eq.s32.totalorder %s21, 0
    %p195 = por %p193, %p194
    %p196 = scmp.ne.s32.totalorder %s184, %s185
    %p197 = scmp.eq.s32.totalorder %s22, 7
    %p198 = por %p196, %p197
    %p200 = scmp.ne.s32.totalorder %s185, %s199
    %p201 = scmp.eq.s32.totalorder %s22, 0
    %p202 = por %p200, %p201
    %s204 = sadd.s32 %s203, 1
    %p207 = scmp.eq.s32.totalorder %s16, 7
    %p208 = scmp.ne.s32.totalorder %s203, %s205
    %p209 = scmp.eq.s32.totalorder %s16, 0
    %p210 = por %p208, %p209
    %p211 = scmp.ne.s32.totalorder %s203, %s205
    %p212 = scmp.eq.s32.totalorder %s21, 7
    %p213 = por %p211, %p212
    %p214 = scmp.ne.s32.totalorder %s205, %s206
    %p215 = scmp.eq.s32.totalorder %s21, 0
    %p216 = por %p214, %p215
    %p217 = scmp.ne.s32.totalorder %s205, %s206
    %p218 = scmp.eq.s32.totalorder %s22, 7
    %p219 = por %p217, %p218
    %p221 = scmp.ne.s32.totalorder %s206, %s220
    %p222 = scmp.eq.s32.totalorder %s22, 0
    %p223 = por %p221, %p222
    %s225 = sadd.s32 %s224, 1
    %p228 = scmp.eq.s32.totalorder %s16, 7
    %p229 = scmp.ne.s32.totalorder %s224, %s226
    %p230 = scmp.eq.s32.totalorder %s16, 0
    %p231 = por %p229, %p230
    %p232 = scmp.ne.s32.totalorder %s224, %s226
    %p233 = scmp.eq.s32.totalorder %s21, 7
    %p234 = por %p232, %p233
    %p235 = scmp.ne.s32.totalorder %s226, %s227
    %p236 = scmp.eq.s32.totalorder %s21, 0
    %p237 = por %p235, %p236
    %p238 = scmp.ne.s32.totalorder %s226, %s227
    %p239 = scmp.eq.s32.totalorder %s22, 7
    %p240 = por %p238, %p239
    %p242 = scmp.ne.s32.totalorder %s227, %s241
    %p243 = scmp.eq.s32.totalorder %s22, 0
    %p244 = por %p242, %p243
    %s246 = sadd.s32 %s245, 1
    %p249 = scmp.eq.s32.totalorder %s16, 7
    %p250 = scmp.ne.s32.totalorder %s245, %s247
    %p251 = scmp.eq.s32.totalorder %s16, 0
    %p252 = por %p250, %p251
    %p253 = scmp.ne.s32.totalorder %s245, %s247
    %p254 = scmp.eq.s32.totalorder %s21, 7
    %p255 = por %p253, %p254
    %p256 = scmp.ne.s32.totalorder %s247, %s248
    %p257 = scmp.eq.s32.totalorder %s21, 0
    %p258 = por %p256, %p257
    %p259 = scmp.ne.s32.totalorder %s247, %s248
    %p260 = scmp.eq.s32.totalorder %s22, 7
    %p261 = por %p259, %p260
    %p263 = scmp.ne.s32.totalorder %s248, %s262
    %p264 = scmp.eq.s32.totalorder %s22, 0
    %p265 = por %p263, %p264
    %s266 = ssub.s32 %s23, %s35
    %s267 = ssub.s32 %s24, %s31
    %s268 = sor.u32 %s266, %s267
    %p269 = scmp.eq.s32.totalorder %s268, 0
    %s271 = sadd.s32 %s270, 1
    %s272 = scalar_select %p269, %s270, %s271
    %p275 = pneg %p269
    %p276 = scmp.eq.s32.totalorder %s16, 7
    %p277 = por %p275, %p276
    %p278 = scmp.ne.s32.totalorder %s270, %s273
    %p279 = scmp.eq.s32.totalorder %s16, 0
    %p280 = por %p278, %p279
    %p281 = scmp.ne.s32.totalorder %s270, %s273
    %p282 = scmp.eq.s32.totalorder %s21, 7
    %p283 = por %p281, %p282
    %p284 = scmp.ne.s32.totalorder %s273, %s274
    %p285 = scmp.eq.s32.totalorder %s21, 0
    %p286 = por %p284, %p285
    %p287 = scmp.ne.s32.totalorder %s273, %s274
    %p288 = scmp.eq.s32.totalorder %s22, 7
    %p289 = por %p287, %p288
    %p291 = scmp.ne.s32.totalorder %s274, %s290
    %p292 = scmp.eq.s32.totalorder %s22, 0
    %p293 = por %p291, %p292
    %p294 = scmp.le.s32.totalorder 1, %s16
    %p295 = scmp.lt.s32.totalorder %s16, 9
    %p296 = pnand %p294, %p295
    %p297 = pneg %p296
    // Predicated region
    $region9: #{tpu_custom_call.1} parent=5 // pred_check
      _
    $region10: #{tpu_custom_call.1} parent=5 // pred_check_branch
      %299 = sbr.rel (%p296) target = $region12
    $region11: #{tpu_custom_call.1} parent=5 // pred_region
      %s300 = ssub.s32 %s16, 1
      // Predicated region
      $region13: #{tpu_custom_call.1} parent=11 // pred_check
        %p301 = pneg %p111
      $region14: #{tpu_custom_call.1} parent=11 // pred_check_branch
        %303 = sbr.rel (%p301) target = $region16
      $region15: #{tpu_custom_call.1} parent=11 // pred_region
        _
      $region16: #{tpu_custom_call.1} parent=11 // pred_fallthru
        _
      // Predicated region
      $region17: #{tpu_custom_call.1} parent=11 // pred_check
        %p304 = pneg %p132
      $region18: #{tpu_custom_call.1} parent=11 // pred_check_branch
        %306 = sbr.rel (%p304) target = $region20
      $region19: #{tpu_custom_call.1} parent=11 // pred_region
        _
      $region20: #{tpu_custom_call.1} parent=11 // pred_fallthru
        _
      // Predicated region
      $region21: #{tpu_custom_call.1} parent=11 // pred_check
        %p307 = pneg %p153
      $region22: #{tpu_custom_call.1} parent=11 // pred_check_branch
        %309 = sbr.rel (%p307) target = $region24
      $region23: #{tpu_custom_call.1} parent=11 // pred_region
        _
      $region24: #{tpu_custom_call.1} parent=11 // pred_fallthru
        _
      // Predicated region
      $region25: #{tpu_custom_call.1} parent=11 // pred_check
        %p310 = pneg %p174
      $region26: #{tpu_custom_call.1} parent=11 // pred_check_branch
        %312 = sbr.rel (%p310) target = $region28
      $region27: #{tpu_custom_call.1} parent=11 // pred_region
        _
      $region28: #{tpu_custom_call.1} parent=11 // pred_fallthru
        _
      // Predicated region
      $region29: #{tpu_custom_call.1} parent=11 // pred_check
        %p313 = pneg %p195
      $region30: #{tpu_custom_call.1} parent=11 // pred_check_branch
        %315 = sbr.rel (%p313) target = $region32
      $region31: #{tpu_custom_call.1} parent=11 // pred_region
        _
      $region32: #{tpu_custom_call.1} parent=11 // pred_fallthru
        _
      // Predicated region
      $region33: #{tpu_custom_call.1} parent=11 // pred_check
        %p316 = pneg %p216
      $region34: #{tpu_custom_call.1} parent=11 // pred_check_branch
        %318 = sbr.rel (%p316) target = $region36
      $region35: #{tpu_custom_call.1} parent=11 // pred_region
        _
      $region36: #{tpu_custom_call.1} parent=11 // pred_fallthru
        _
      // Predicated region
      $region37: #{tpu_custom_call.1} parent=11 // pred_check
        %p319 = pneg %p237
      $region38: #{tpu_custom_call.1} parent=11 // pred_check_branch
        %321 = sbr.rel (%p319) target = $region40
      $region39: #{tpu_custom_call.1} parent=11 // pred_region
        _
      $region40: #{tpu_custom_call.1} parent=11 // pred_fallthru
        _
      // Predicated region
      $region41: #{tpu_custom_call.1} parent=11 // pred_check
        %p322 = pneg %p258
      $region42: #{tpu_custom_call.1} parent=11 // pred_check_branch
        %324 = sbr.rel (%p322) target = $region44
      $region43: #{tpu_custom_call.1} parent=11 // pred_region
        _
      $region44: #{tpu_custom_call.1} parent=11 // pred_fallthru
        _
    $region12: #{tpu_custom_call.1} parent=5 // pred_fallthru
      _
    %p325 = scmp.lt.s32.totalorder %s16, 8
    // Predicated region
    $region45: #{tpu_custom_call.1} parent=5 // pred_check
      %p326 = pneg %p325
    $region46: #{tpu_custom_call.1} parent=5 // pred_check_branch
      %328 = sbr.rel (%p326) target = $region48
    $region47: #{tpu_custom_call.1} parent=5 // pred_region
      // Predicated region
      $region49: #{tpu_custom_call.1} parent=47 // pred_check
        %p329 = pneg %p56
      $region50: #{tpu_custom_call.1} parent=47 // pred_check_branch
        %331 = sbr.rel (%p329) target = $region52
      $region51: #{tpu_custom_call.1} parent=47 // pred_region
        %s332 = ssub.s32 %s24, 1
        %p333 = scmp.gt.s32.totalorder %s332, 0
        %s334 = scalar_select %p333, %s332, 0
        %s335 = smul.u32 2, %s334
        %p336 = scmp.lt.s32.totalorder %s23, 1
        %s337 = scalar_select %p336, %s23, 1
        %p338 = scmp.lt.s32.totalorder %s335, 7
        %s339 = scalar_select %p338, %s335, 7
        %s340 = smul.addr %s337, 8
        %s341 = sadd.s32 %s339, %s340
        %s342 = smul.addr %s341, 4
        %s343 = scalar_lea.vmem %s0, %s342
        %s344 = ssub.s32 %s24, 1
        %p345 = scmp.gt.s32.totalorder %s344, 0
        %s346 = scalar_select %p345, %s344, 0
        %s347 = smul.u32 2, %s346
      $region52: #{tpu_custom_call.1} parent=47 // pred_fallthru
        _
      // Predicated region
      $region53: #{tpu_custom_call.1} parent=47 // pred_check
        %p348 = pneg %p84
      $region54: #{tpu_custom_call.1} parent=47 // pred_check_branch
        %350 = sbr.rel (%p348) target = $region56
      $region55: #{tpu_custom_call.1} parent=47 // pred_region
        %s351 = smul.u32 2, %s24
        %p352 = scmp.lt.s32.totalorder %s23, 1
        %s353 = scalar_select %p352, %s23, 1
        %p354 = scmp.lt.s32.totalorder %s351, 7
        %s355 = scalar_select %p354, %s351, 7
        %s356 = smul.addr %s353, 8
        %s357 = sadd.s32 %s355, %s356
        %s358 = smul.addr %s357, 4
        %s359 = scalar_lea.vmem %s1, %s358
        %s360 = smul.u32 2, %s24
      $region56: #{tpu_custom_call.1} parent=47 // pred_fallthru
        _
    $region48: #{tpu_custom_call.1} parent=5 // pred_fallthru
      _
    %p361 = scmp.le.s32.totalorder 1, %s16
    %p362 = scmp.lt.s32.totalorder %s16, 9
    %p363 = pnand %p361, %p362
    %p364 = pneg %p363
    // Predicated region
    $region57: #{tpu_custom_call.1} parent=5 // pred_check
      _
    $region58: #{tpu_custom_call.1} parent=5 // pred_check_branch
      %366 = sbr.rel (%p363) target = $region60
    $region59: #{tpu_custom_call.1} parent=5 // pred_region
      %s367 = ssub.s32 %s16, 1
      %s368 = ssub.s32 %s26, 1
      %p369 = scmp.gt.s32.totalorder %s368, 0
      %s370 = scalar_select %p369, %s368, 0
      %s371 = smul.u32 2, %s370
      %p372 = scmp.lt.s32.totalorder %s25, 1
      %s373 = scalar_select %p372, %s25, 1
      %p374 = scmp.lt.s32.totalorder %s371, 7
      %s375 = scalar_select %p374, %s371, 7
      %s376 = smul.addr %s373, 8
      %s377 = sadd.s32 %s375, %s376
      %s378 = smul.addr %s377, 4
      %s379 = scalar_lea.vmem %s0, %s378
      %p380 = pneg %p62
      %p381 = pneg %p59
      %s382 = smul.u32 2, %s26
      %p383 = scmp.lt.s32.totalorder %s25, 1
      %s384 = scalar_select %p383, %s25, 1
      %p385 = scmp.lt.s32.totalorder %s382, 7
      %s386 = scalar_select %p385, %s382, 7
      %s387 = smul.addr %s384, 8
      %s388 = sadd.s32 %s386, %s387
      %s389 = smul.addr %s388, 4
      %s390 = scalar_lea.vmem %s1, %s389
      %p391 = pneg %p90
      %p392 = pneg %p87
      %p393 = pneg %p111
      %p394 = pneg %p108
      %p395 = pneg %p132
      %p396 = pneg %p129
      %p397 = pneg %p153
      %p398 = pneg %p150
      %p399 = pneg %p174
      %p400 = pneg %p171
      %p401 = pneg %p195
      %p402 = pneg %p192
      %p403 = pneg %p216
      %p404 = pneg %p213
      %p405 = pneg %p237
      %p406 = pneg %p234
      %p407 = pneg %p258
      %p408 = pneg %p255
      %p409 = pneg %p286
      %p410 = pneg %p283
      %s411 = smul.u32 2, %s26
      %p412 = scmp.lt.s32.totalorder %s25, 1
      %s413 = scalar_select %p412, %s25, 1
      %p414 = scmp.lt.s32.totalorder %s411, 7
      %s415 = scalar_select %p414, %s411, 7
      %s416 = smul.addr %s413, 8
      %s417 = sadd.s32 %s415, %s416
      %s418 = smul.addr %s417, 4
      %s419 = scalar_lea.vmem %s10, %s418
      %s420 = ssub.s32 %s26, 1
      %p421 = scmp.gt.s32.totalorder %s420, 0
      %s422 = scalar_select %p421, %s420, 0
      %s423 = smul.u32 2, %s422
      %p424 = scmp.lt.s32.totalorder %s25, 1
      %s425 = scalar_select %p424, %s25, 1
      %p426 = scmp.lt.s32.totalorder %s423, 7
      %s427 = scalar_select %p426, %s423, 7
      %s428 = smul.addr %s425, 8
      %s429 = sadd.s32 %s427, %s428
      %s430 = smul.addr %s429, 4
      %s431 = scalar_lea.vmem %s0, %s430
      %s432 = ssub.s32 %s26, 1
      %p433 = scmp.gt.s32.totalorder %s432, 0
      %s434 = scalar_select %p433, %s432, 0
      %s435 = smul.u32 2, %s434
      %s436 = smul.u32 2, %s26
      %p437 = scmp.lt.s32.totalorder %s25, 1
      %s438 = scalar_select %p437, %s25, 1
      %p439 = scmp.lt.s32.totalorder %s436, 7
      %s440 = scalar_select %p439, %s436, 7
      %s441 = smul.addr %s438, 8
      %s442 = sadd.s32 %s440, %s441
      %s443 = smul.addr %s442, 4
      %s444 = scalar_lea.vmem %s1, %s443
      %s445 = smul.u32 2, %s26
      %s446 = smul.u32 2, %s26
      %p447 = scmp.lt.s32.totalorder %s25, 1
      %s448 = scalar_select %p447, %s25, 1
      %p449 = scmp.lt.s32.totalorder %s446, 7
      %s450 = scalar_select %p449, %s446, 7
      %s451 = smul.addr %s448, 8
      %s452 = sadd.s32 %s450, %s451
      %s453 = smul.addr %s452, 4
      %s454 = scalar_lea.vmem %s10, %s453
      %s455 = smul.u32 2, %s26
      %v457 = vld [vmem:[%s2] sm:$0x1]
      %v458 = vld [vmem:[%s3] sm:$0x1]
      %v459 = vld [vmem:[%s444] sm:$0xf]
      %v460 = vld [vmem:[%s444 + $0x4] sm:$0xf]
      %v461 = vunpack.c.l.bf16 %v459
      %v462 = vunpack.c.l.bf16 %v460
      %v464 = vlaneseq
      %v465 = vshrl.u32 %v464, 7
      %v466 = vsub.s32 0, %v465
      %v467 = vrot.slane %v457, %v466
      %v469 = vmul.f32 %v467, %v461
      %v470 = vmul.f32 %v467, %v462
      %v471 = vand.u32 2147483647, %v469
      %vm472 = vcmp.le.f32.partialorder %v471, 0.7853982
      %vm473 = vcmp.lt.s32.totalorder %v469, 0
      %v474 = vand.u32 %v469, 2139095040
      %v475 = vshrl.u32 %v474, 23
      %v476 = vsub.s32 %v475, 127
      %v477 = vand.u32 2147483647, %v469
      %v478 = vand.u32 %v477, 8388607
      %v479 = vor.u32 %v478, 8388608
      %v480 = vsub.s32 0, %v479
      %v481 = vadd.s32 %v476, 1
      %vm482 = vcmp.gt.s32.totalorder %v481, 0
      %v483 = vsel %vm482, %v481, 0
      %v484 = vshrl.u32 %v483, 5
      %v485 = vand.u32 %v483, 31
      %v486 = vsub.s32 32, %v485
      %v487 = vshrl.u32 683565275, %v486
      %v488 = vshll.u32 683565275, %v485
      %v489 = vshrl.u32 2475754826, %v486
      %v490 = vor.u32 %v488, %v489
      %v491 = vshll.u32 2475754826, %v485
      %v492 = vshrl.u32 2131351028, %v486
      %v493 = vor.u32 %v491, %v492
      %v494 = vshll.u32 2131351028, %v485
      %v495 = vshrl.u32 2102212464, %v486
      %v496 = vor.u32 %v494, %v495
      %v497 = vshll.u32 2102212464, %v485
      %v498 = vshrl.u32 920167782, %v486
      %v499 = vor.u32 %v497, %v498
      %v500 = vshll.u32 920167782, %v485
      %v501 = vshrl.u32 1326507024, %v486
      %v502 = vor.u32 %v500, %v501
      %vm503 = vcmp.lt.s32.totalorder %v484, 1
      %vm504 = vcmp.lt.s32.totalorder %v484, 2
      %vm505 = vcmp.lt.s32.totalorder %v484, 3
      %vm506 = vcmp.lt.s32.totalorder %v484, 4
      %v507 = vsel %vm503, %v487, %v490
      %v508 = vsel %vm506, %v496, 2102212464
      %v509 = vsel %vm505, %v493, %v508
      %v510 = vsel %vm504, %v507, %v509
      %v511 = vsel %vm503, %v490, %v493
      %v512 = vsel %vm506, %v499, 920167782
      %v513 = vsel %vm505, %v496, %v512
      %v514 = vsel %vm504, %v511, %v513
      %v515 = vsel %vm503, %v493, %v496
      %v516 = vsel %vm506, %v502, 1326507024
      %v517 = vsel %vm505, %v499, %v516
      %v518 = vsel %vm504, %v515, %v517
      %v519 = vshll.u32 %v479, 8
      %v520 = vmul.u32.u64.compose %v519, %v518
      %v521 = vextract.low.u32 %v520
      %v522 = vextract.high.u32 %v520
      %v523 = vmul.u32.u64.compose %v519, %v514
      %v524 = vextract.low.u32 %v523
      %v525 = vextract.high.u32 %v523
      %v526 = vmul.u32 %v519, %v510
      %v527 = vadd.s32 %v522, %v524
      %vm528 = vc.u32 %v522, %v524
      %v529 = vadd.s32 %v525, 1
      %v530 = vsel %vm528, %v529, %v525
      %v531 = vadd.s32 %v526, %v530
      %v532 = vadd.s32 %v531, 536870912
      %v533 = vshrl.u32 %v532, 30
      %v534 = vshll.u32 %v533, 30
      %v535 = vsub.s32 %v531, %v534
      %vm536 = vcmp.lt.s32.totalorder %v535, 0
      %v537 = vsub.s32 0, %v535
      %v538 = vsel %vm536, %v537, %v535
      %v539 = vclz %v538
      %v540 = vsub.s32 %v539, 2
      %vm541 = vcmp.gt.s32.totalorder 0, %v540
      %v542 = vsel %vm541, 0, %v540
      %v543 = vsub.s32 32, %v542
      %v544 = vshll.u32 %v535, %v542
      %v545 = vshrl.u32 %v527, %v543
      %v546 = vor.u32 %v544, %v545
      %v547 = vsub.s32 4294967266, %v542
      %v548 = vadd.s32 %v547, 127
      %v549 = vshll.u32 %v548, 23
      %v550 = vor.u32 4788187, %v549
      %v551 = vand.u32 2147483647, %v550
      %v553 = vcvt.s32.f32 %v546
      %v554 = vmul.f32 %v553, %v551
      %v555 = vxor.u32 %v554, 2147483648
      %v556 = vsel %vm473, %v555, %v554
      %v557 = vsub.s32 4, %v533
      %v558 = vsel %vm473, %v557, %v533
      %v559 = vsel %vm472, %v469, %v556
      %v560 = vsel %vm472, 0, %v558
      %v561 = vcosq.f32.pop %v559
      %v562 = vsinq.f32.pop %v559
      %vm563 = vweird.f32 %v469
      %v564 = vadd.s32 %v560, 3
      %v565 = vand.u32 %v564, 3
      %vm566 = vcmp.lt.s32.totalorder %v565, 2
      %vm567 = vcmp.eq.s32.totalorder %v565, 0
      %v568 = vxor.u32 %v562, 2147483648
      %v569 = vsel %vm567, %v561, %v568
      %vm570 = vcmp.eq.s32.totalorder %v565, 2
      %v571 = vxor.u32 %v561, 2147483648
      %v572 = vsel %vm570, %v571, %v562
      %v573 = vsel %vm566, %v569, %v572
      %v574 = vsel %vm563, nan, %v573
      %v575 = vand.u32 2147483647, %v470
      %vm576 = vcmp.le.f32.partialorder %v575, 0.7853982
      %vm577 = vcmp.lt.s32.totalorder %v470, 0
      %v578 = vand.u32 %v470, 2139095040
      %v579 = vshrl.u32 %v578, 23
      %v580 = vsub.s32 %v579, 127
      %v581 = vand.u32 2147483647, %v470
      %v582 = vand.u32 %v581, 8388607
      %v583 = vor.u32 %v582, 8388608
      %v584 = vsub.s32 0, %v583
      %v585 = vadd.s32 %v580, 1
      %vm586 = vcmp.gt.s32.totalorder %v585, 0
      %v587 = vsel %vm586, %v585, 0
      %v588 = vshrl.u32 %v587, 5
      %v589 = vand.u32 %v587, 31
      %v590 = vsub.s32 32, %v589
      %v591 = vshrl.u32 683565275, %v590
      %v592 = vshll.u32 683565275, %v589
      %v593 = vshrl.u32 2475754826, %v590
      %v594 = vor.u32 %v592, %v593
      %v595 = vshll.u32 2475754826, %v589
      %v596 = vshrl.u32 2131351028, %v590
      %v597 = vor.u32 %v595, %v596
      %v598 = vshll.u32 2131351028, %v589
      %v599 = vshrl.u32 2102212464, %v590
      %v600 = vor.u32 %v598, %v599
      %v601 = vshll.u32 2102212464, %v589
      %v602 = vshrl.u32 920167782, %v590
      %v603 = vor.u32 %v601, %v602
      %v604 = vshll.u32 920167782, %v589
      %v605 = vshrl.u32 1326507024, %v590
      %v606 = vor.u32 %v604, %v605
      %vm607 = vcmp.lt.s32.totalorder %v588, 1
      %vm608 = vcmp.lt.s32.totalorder %v588, 2
      %vm609 = vcmp.lt.s32.totalorder %v588, 3
      %vm610 = vcmp.lt.s32.totalorder %v588, 4
      %v611 = vsel %vm607, %v591, %v594
      %v612 = vsel %vm610, %v600, 2102212464
      %v613 = vsel %vm609, %v597, %v612
      %v614 = vsel %vm608, %v611, %v613
      %v615 = vsel %vm607, %v594, %v597
      %v616 = vsel %vm610, %v603, 920167782
      %v617 = vsel %vm609, %v600, %v616
      %v618 = vsel %vm608, %v615, %v617
      %v619 = vsel %vm607, %v597, %v600
      %v620 = vsel %vm610, %v606, 1326507024
      %v621 = vsel %vm609, %v603, %v620
      %v622 = vsel %vm608, %v619, %v621
      %v623 = vshll.u32 %v583, 8
      %v624 = vmul.u32.u64.compose %v623, %v622
      %v625 = vextract.low.u32 %v624
      %v626 = vextract.high.u32 %v624
      %v627 = vmul.u32.u64.compose %v623, %v618
      %v628 = vextract.low.u32 %v627
      %v629 = vextract.high.u32 %v627
      %v630 = vmul.u32 %v623, %v614
      %v631 = vadd.s32 %v626, %v628
      %vm632 = vc.u32 %v626, %v628
      %v633 = vadd.s32 %v629, 1
      %v634 = vsel %vm632, %v633, %v629
      %v635 = vadd.s32 %v630, %v634
      %v636 = vadd.s32 %v635, 536870912
      %v637 = vshrl.u32 %v636, 30
      %v638 = vshll.u32 %v637, 30
      %v639 = vsub.s32 %v635, %v638
      %vm640 = vcmp.lt.s32.totalorder %v639, 0
      %v641 = vsub.s32 0, %v639
      %v642 = vsel %vm640, %v641, %v639
      %v643 = vclz %v642
      %v644 = vsub.s32 %v643, 2
      %vm645 = vcmp.gt.s32.totalorder 0, %v644
      %v646 = vsel %vm645, 0, %v644
      %v647 = vsub.s32 32, %v646
      %v648 = vshll.u32 %v639, %v646
      %v649 = vshrl.u32 %v631, %v647
      %v650 = vor.u32 %v648, %v649
      %v651 = vsub.s32 4294967266, %v646
      %v652 = vadd.s32 %v651, 127
      %v653 = vshll.u32 %v652, 23
      %v654 = vor.u32 4788187, %v653
      %v655 = vand.u32 2147483647, %v654
      %v657 = vcvt.s32.f32 %v650
      %v658 = vmul.f32 %v657, %v655
      %v659 = vxor.u32 %v658, 2147483648
      %v660 = vsel %vm577, %v659, %v658
      %v661 = vsub.s32 4, %v637
      %v662 = vsel %vm577, %v661, %v637
      %v663 = vsel %vm576, %v470, %v660
      %v664 = vsel %vm576, 0, %v662
      %v665 = vcosq.f32.pop %v663
      %v666 = vsinq.f32.pop %v663
      %vm667 = vweird.f32 %v470
      %v668 = vadd.s32 %v664, 3
      %v669 = vand.u32 %v668, 3
      %vm670 = vcmp.lt.s32.totalorder %v669, 2
      %vm671 = vcmp.eq.s32.totalorder %v669, 0
      %v672 = vxor.u32 %v666, 2147483648
      %v673 = vsel %vm671, %v665, %v672
      %vm674 = vcmp.eq.s32.totalorder %v669, 2
      %v675 = vxor.u32 %v665, 2147483648
      %v676 = vsel %vm674, %v675, %v666
      %v677 = vsel %vm670, %v673, %v676
      %v678 = vsel %vm667, nan, %v677
      %v679 = vmul.f32 %v574, %v574
      %v680 = vmul.f32 %v678, %v678
      %v682 = vlaneseq
      %v683 = vshrl.u32 %v682, 7
      %v684 = vsub.s32 0, %v683
      %v685 = vrot.slane %v458, %v684
      %v687 = vmul.f32 %v685, %v679
      %v688 = vmul.f32 %v685, %v680
      %v689 = vadd.f32 %v461, %v687
      %v690 = vadd.f32 %v462, %v688
      %v691 = vpack.c.bf16 %v690, %v689
      %vm692 = vcmask 64512
      %693 = vst.msk [vmem:[#allocation2 + $0x8] sm:$0xff] %vm692, %v691
      %p694 = scmp.eq.s32.totalorder %s26, 0
      // Predicated region
      $region61: #{tpu_custom_call.1} parent=59 // pred_check
        %p695 = pneg %p694
      $region62: #{tpu_custom_call.1} parent=59 // pred_check_branch
        %697 = sbr.rel (%p695) target = $region64
      $region63: #{tpu_custom_call.1} parent=59 // pred_region
        %698 = vst.msk [vmem:[#allocation2] sm:$0xff] %vm692, 0
      $region64: #{tpu_custom_call.1} parent=59 // pred_fallthru
        _
      %p699 = scmp.gt.s32.totalorder %s26, 0
      // Predicated region
      $region65: #{tpu_custom_call.1} parent=59 // pred_check
        %p700 = pneg %p699
      $region66: #{tpu_custom_call.1} parent=59 // pred_check_branch
        %702 = sbr.rel (%p700) target = $region68
      $region67: #{tpu_custom_call.1} parent=59 // pred_region
        %v703 = vld [vmem:[%s431] sm:$0xf]
        %v704 = vld [vmem:[%s431 + $0x4] sm:$0xf]
        %v705 = vunpack.c.l.bf16 %v703
        %v706 = vunpack.c.l.bf16 %v704
        %v707 = vmul.f32 %v467, %v705
        %v708 = vmul.f32 %v467, %v706
        %v709 = vand.u32 2147483647, %v707
        %vm710 = vcmp.le.f32.partialorder %v709, 0.7853982
        %vm711 = vcmp.lt.s32.totalorder %v707, 0
        %v712 = vand.u32 %v707, 2139095040
        %v713 = vshrl.u32 %v712, 23
        %v714 = vsub.s32 %v713, 127
        %v715 = vand.u32 2147483647, %v707
        %v716 = vand.u32 %v715, 8388607
        %v717 = vor.u32 %v716, 8388608
        %v718 = vsub.s32 0, %v717
        %v719 = vadd.s32 %v714, 1
        %vm720 = vcmp.gt.s32.totalorder %v719, 0
        %v721 = vsel %vm720, %v719, 0
        %v722 = vshrl.u32 %v721, 5
        %v723 = vand.u32 %v721, 31
        %v724 = vsub.s32 32, %v723
        %v725 = vshrl.u32 683565275, %v724
        %v726 = vshll.u32 683565275, %v723
        %v727 = vshrl.u32 2475754826, %v724
        %v728 = vor.u32 %v726, %v727
        %v729 = vshll.u32 2475754826, %v723
        %v730 = vshrl.u32 2131351028, %v724
        %v731 = vor.u32 %v729, %v730
        %v732 = vshll.u32 2131351028, %v723
        %v733 = vshrl.u32 2102212464, %v724
        %v734 = vor.u32 %v732, %v733
        %v735 = vshll.u32 2102212464, %v723
        %v736 = vshrl.u32 920167782, %v724
        %v737 = vor.u32 %v735, %v736
        %v738 = vshll.u32 920167782, %v723
        %v739 = vshrl.u32 1326507024, %v724
        %v740 = vor.u32 %v738, %v739
        %vm741 = vcmp.lt.s32.totalorder %v722, 1
        %vm742 = vcmp.lt.s32.totalorder %v722, 2
        %vm743 = vcmp.lt.s32.totalorder %v722, 3
        %vm744 = vcmp.lt.s32.totalorder %v722, 4
        %v745 = vsel %vm741, %v725, %v728
        %v746 = vsel %vm744, %v734, 2102212464
        %v747 = vsel %vm743, %v731, %v746
        %v748 = vsel %vm742, %v745, %v747
        %v749 = vsel %vm741, %v728, %v731
        %v750 = vsel %vm744, %v737, 920167782
        %v751 = vsel %vm743, %v734, %v750
        %v752 = vsel %vm742, %v749, %v751
        %v753 = vsel %vm741, %v731, %v734
        %v754 = vsel %vm744, %v740, 1326507024
        %v755 = vsel %vm743, %v737, %v754
        %v756 = vsel %vm742, %v753, %v755
        %v757 = vshll.u32 %v717, 8
        %v758 = vmul.u32.u64.compose %v757, %v756
        %v759 = vextract.low.u32 %v758
        %v760 = vextract.high.u32 %v758
        %v761 = vmul.u32.u64.compose %v757, %v752
        %v762 = vextract.low.u32 %v761
        %v763 = vextract.high.u32 %v761
        %v764 = vmul.u32 %v757, %v748
        %v765 = vadd.s32 %v760, %v762
        %vm766 = vc.u32 %v760, %v762
        %v767 = vadd.s32 %v763, 1
        %v768 = vsel %vm766, %v767, %v763
        %v769 = vadd.s32 %v764, %v768
        %v770 = vadd.s32 %v769, 536870912
        %v771 = vshrl.u32 %v770, 30
        %v772 = vshll.u32 %v771, 30
        %v773 = vsub.s32 %v769, %v772
        %vm774 = vcmp.lt.s32.totalorder %v773, 0
        %v775 = vsub.s32 0, %v773
        %v776 = vsel %vm774, %v775, %v773
        %v777 = vclz %v776
        %v778 = vsub.s32 %v777, 2
        %vm779 = vcmp.gt.s32.totalorder 0, %v778
        %v780 = vsel %vm779, 0, %v778
        %v781 = vsub.s32 32, %v780
        %v782 = vshll.u32 %v773, %v780
        %v783 = vshrl.u32 %v765, %v781
        %v784 = vor.u32 %v782, %v783
        %v785 = vsub.s32 4294967266, %v780
        %v786 = vadd.s32 %v785, 127
        %v787 = vshll.u32 %v786, 23
        %v788 = vor.u32 4788187, %v787
        %v789 = vand.u32 2147483647, %v788
        %v791 = vcvt.s32.f32 %v784
        %v792 = vmul.f32 %v791, %v789
        %v793 = vxor.u32 %v792, 2147483648
        %v794 = vsel %vm711, %v793, %v792
        %v795 = vsub.s32 4, %v771
        %v796 = vsel %vm711, %v795, %v771
        %v797 = vsel %vm710, %v707, %v794
        %v798 = vsel %vm710, 0, %v796
        %v799 = vcosq.f32.pop %v797
        %v800 = vsinq.f32.pop %v797
        %vm801 = vweird.f32 %v707
        %v802 = vadd.s32 %v798, 3
        %v803 = vand.u32 %v802, 3
        %vm804 = vcmp.lt.s32.totalorder %v803, 2
        %vm805 = vcmp.eq.s32.totalorder %v803, 0
        %v806 = vxor.u32 %v800, 2147483648
        %v807 = vsel %vm805, %v799, %v806
        %vm808 = vcmp.eq.s32.totalorder %v803, 2
        %v809 = vxor.u32 %v799, 2147483648
        %v810 = vsel %vm808, %v809, %v800
        %v811 = vsel %vm804, %v807, %v810
        %v812 = vsel %vm801, nan, %v811
        %v813 = vand.u32 2147483647, %v708
        %vm814 = vcmp.le.f32.partialorder %v813, 0.7853982
        %vm815 = vcmp.lt.s32.totalorder %v708, 0
        %v816 = vand.u32 %v708, 2139095040
        %v817 = vshrl.u32 %v816, 23
        %v818 = vsub.s32 %v817, 127
        %v819 = vand.u32 2147483647, %v708
        %v820 = vand.u32 %v819, 8388607
        %v821 = vor.u32 %v820, 8388608
        %v822 = vsub.s32 0, %v821
        %v823 = vadd.s32 %v818, 1
        %vm824 = vcmp.gt.s32.totalorder %v823, 0
        %v825 = vsel %vm824, %v823, 0
        %v826 = vshrl.u32 %v825, 5
        %v827 = vand.u32 %v825, 31
        %v828 = vsub.s32 32, %v827
        %v829 = vshrl.u32 683565275, %v828
        %v830 = vshll.u32 683565275, %v827
        %v831 = vshrl.u32 2475754826, %v828
        %v832 = vor.u32 %v830, %v831
        %v833 = vshll.u32 2475754826, %v827
        %v834 = vshrl.u32 2131351028, %v828
        %v835 = vor.u32 %v833, %v834
        %v836 = vshll.u32 2131351028, %v827
        %v837 = vshrl.u32 2102212464, %v828
        %v838 = vor.u32 %v836, %v837
        %v839 = vshll.u32 2102212464, %v827
        %v840 = vshrl.u32 920167782, %v828
        %v841 = vor.u32 %v839, %v840
        %v842 = vshll.u32 920167782, %v827
        %v843 = vshrl.u32 1326507024, %v828
        %v844 = vor.u32 %v842, %v843
        %vm845 = vcmp.lt.s32.totalorder %v826, 1
        %vm846 = vcmp.lt.s32.totalorder %v826, 2
        %vm847 = vcmp.lt.s32.totalorder %v826, 3
        %vm848 = vcmp.lt.s32.totalorder %v826, 4
        %v849 = vsel %vm845, %v829, %v832
        %v850 = vsel %vm848, %v838, 2102212464
        %v851 = vsel %vm847, %v835, %v850
        %v852 = vsel %vm846, %v849, %v851
        %v853 = vsel %vm845, %v832, %v835
        %v854 = vsel %vm848, %v841, 920167782
        %v855 = vsel %vm847, %v838, %v854
        %v856 = vsel %vm846, %v853, %v855
        %v857 = vsel %vm845, %v835, %v838
        %v858 = vsel %vm848, %v844, 1326507024
        %v859 = vsel %vm847, %v841, %v858
        %v860 = vsel %vm846, %v857, %v859
        %v861 = vshll.u32 %v821, 8
        %v862 = vmul.u32.u64.compose %v861, %v860
        %v863 = vextract.low.u32 %v862
        %v864 = vextract.high.u32 %v862
        %v865 = vmul.u32.u64.compose %v861, %v856
        %v866 = vextract.low.u32 %v865
        %v867 = vextract.high.u32 %v865
        %v868 = vmul.u32 %v861, %v852
        %v869 = vadd.s32 %v864, %v866
        %vm870 = vc.u32 %v864, %v866
        %v871 = vadd.s32 %v867, 1
        %v872 = vsel %vm870, %v871, %v867
        %v873 = vadd.s32 %v868, %v872
        %v874 = vadd.s32 %v873, 536870912
        %v875 = vshrl.u32 %v874, 30
        %v876 = vshll.u32 %v875, 30
        %v877 = vsub.s32 %v873, %v876
        %vm878 = vcmp.lt.s32.totalorder %v877, 0
        %v879 = vsub.s32 0, %v877
        %v880 = vsel %vm878, %v879, %v877
        %v881 = vclz %v880
        %v882 = vsub.s32 %v881, 2
        %vm883 = vcmp.gt.s32.totalorder 0, %v882
        %v884 = vsel %vm883, 0, %v882
        %v885 = vsub.s32 32, %v884
        %v886 = vshll.u32 %v877, %v884
        %v887 = vshrl.u32 %v869, %v885
        %v888 = vor.u32 %v886, %v887
        %v889 = vsub.s32 4294967266, %v884
        %v890 = vadd.s32 %v889, 127
        %v891 = vshll.u32 %v890, 23
        %v892 = vor.u32 4788187, %v891
        %v893 = vand.u32 2147483647, %v892
        %v895 = vcvt.s32.f32 %v888
        %v896 = vmul.f32 %v895, %v893
        %v897 = vxor.u32 %v896, 2147483648
        %v898 = vsel %vm815, %v897, %v896
        %v899 = vsub.s32 4, %v875
        %v900 = vsel %vm815, %v899, %v875
        %v901 = vsel %vm814, %v708, %v898
        %v902 = vsel %vm814, 0, %v900
        %v903 = vcosq.f32.pop %v901
        %v904 = vsinq.f32.pop %v901
        %vm905 = vweird.f32 %v708
        %v906 = vadd.s32 %v902, 3
        %v907 = vand.u32 %v906, 3
        %vm908 = vcmp.lt.s32.totalorder %v907, 2
        %vm909 = vcmp.eq.s32.totalorder %v907, 0
        %v910 = vxor.u32 %v904, 2147483648
        %v911 = vsel %vm909, %v903, %v910
        %vm912 = vcmp.eq.s32.totalorder %v907, 2
        %v913 = vxor.u32 %v903, 2147483648
        %v914 = vsel %vm912, %v913, %v904
        %v915 = vsel %vm908, %v911, %v914
        %v916 = vsel %vm905, nan, %v915
        %v917 = vmul.f32 %v812, %v812
        %v918 = vmul.f32 %v916, %v916
        %v919 = vmul.f32 %v685, %v917
        %v920 = vmul.f32 %v685, %v918
        %v921 = vadd.f32 %v705, %v919
        %v922 = vadd.f32 %v706, %v920
        %v923 = vpack.c.bf16 %v922, %v921
        %924 = vst.msk [vmem:[#allocation2] sm:$0xff] %vm692, %v923
      $region68: #{tpu_custom_call.1} parent=59 // pred_fallthru
        _
      %v925 = vld [vmem:[#allocation2] sm:$0x80]
      %v926 = vld [vmem:[#allocation2 + $0x8] sm:$0x7f]
      %vm929 = vcmask 1040384
      %v930 = vrot.slane %v925, 7
      %v931 = vrot.slane %v926, 7
      %v932 = vsel %vm929, %v930, %v931
      %934 = vst.msk [vmem:[#allocation3] sm:$0xff] %vm692, %v932
      %v935 = vld [vmem:[#allocation2] sm:$0x80]
      %v936 = vld [vmem:[#allocation2 + $0x8] sm:$0xff]
      %vm937 = vsmask.f32 256
      %v939 = vshrl.u32 %v935, 16
      %v941 = vrot.slane %v939, 7
      %v943 = vshrl.u32 %v936, 16
      %v945 = vrot.slane %v943, 7
      %v946 = vshll.u32 %v936, 16
      %v948 = vor.u32 %v945, %v946
      %v949 = vsel %vm937, %v941, %v948
      %950 = vrot.lane.b32.xlu0 %v949, 8
      %v951 = vpop.permute.xlu0 %950
      %vm953 = vcmask 130112
      %954 = vst.msk [vmem:[#allocation3] sm:$0xff] %vm953, %v951
      %956 = vrot.lane.b32.xlu0 %v691, 16
      %v957 = vpop.permute.xlu0 %956
      %vm959 = vcmask 195712
      %960 = vst.msk [vmem:[#allocation3] sm:$0xff] %vm959, %v957
      %v961 = vld [vmem:[#allocation3] sm:$0xff]
      %v962 = vld [vmem:[%s4] sm:$0xf]
      %v963 = vld [vmem:[%s4 + $0x4] sm:$0xf]
      %v964 = vld [vmem:[%s4 + $0x8] sm:$0xf]
      %v965 = vld [vmem:[%s5] sm:$0x1]
      %v967 = vlaneseq
      %v968 = vshrl.u32 %v967, 7
      %v969 = vsub.s32 0, %v968
      %v970 = vrot.slane %v965, %v969
      %v975 = vunpack.c.l.b16 %v962
      %v976 = vunpack.c.l.b16 %v963
      %v977 = vunpack.c.l.b16 %v964
      %v978 = vpack.c.b16 %v976, %v975
      %v979 = vpack.c.b16 %v977, %v977
      %vm981 = vcmask 195584
      %v983 = vsel %vm981, %v961, 0
      %vm985 = vcmask 1043456
      %v987 = vsel %vm985, %v979, 0
      %989 = vmatprep.subr.bf16.mxu0 0
      %990 = vmatpush1.bf16.msra.mxu0 %v978
      %991 = vmatprep.subr.bf16.mxu0 0
      %992 = vmatpush1.bf16.msra.mxu0 %v987
      %993 = vmatprep.subr.bf16.mxu0 0
      %994 = vmatpush1.bf16.msra.mxu0 0
      %995 = vmatprep.subr.bf16.mxu0 0
      %996 = vmatpush1.bf16.msra.mxu0 0
      %997 = vmatprep.subr.bf16.mxu0 0
      %998 = vmatpush1.bf16.msra.mxu0 0
      %999 = vmatprep.subr.bf16.mxu0 0
      %1000 = vmatpush1.bf16.msra.mxu0 0
      %1001 = vmatprep.subr.bf16.mxu0 0
      %1002 = vmatpush1.bf16.msra.mxu0 0
      %1003 = vmatprep.subr.bf16.mxu0 0
      %1004 = vmatpush1.bf16.msra.mxu0 0
      %1005 = vmatprep.subr.bf16.mxu0 0
      %1006 = vmatpush1.bf16.msra.mxu0 0
      %1007 = vmatprep.subr.bf16.mxu0 0
      %1008 = vmatpush1.bf16.msra.mxu0 0
      %1009 = vmatprep.subr.bf16.mxu0 0
      %1010 = vmatpush1.bf16.msra.mxu0 0
      %1011 = vmatprep.subr.bf16.mxu0 0
      %1012 = vmatpush1.bf16.msra.mxu0 0
      %1013 = vmatprep.subr.bf16.mxu0 0
      %1014 = vmatpush1.bf16.msra.mxu0 0
      %1015 = vmatprep.subr.bf16.mxu0 0
      %1016 = vmatpush1.bf16.msra.mxu0 0
      %1017 = vmatprep.subr.bf16.mxu0 0
      %1018 = vmatpush1.bf16.msra.mxu0 0
      %1019 = vmatprep.subr.bf16.mxu0 0
      %1020 = vmatpush1.bf16.msra.mxu0 0
      %1021 = vmatprep.mubr.bf16.mxu0 0
      %1022 = vmatmul.mubr.bf16.gmra.mrb[0].mxu0 %v983
      %v1023 = vpop.f32.mrb[0].mxu0
      %v1024 = vadd.f32 %v970, %v1023
      %v1025 = vpop.f32.mrb[0].mxu0
      %v1026 = vpop.f32.mrb[0].mxu0
      %v1027 = vadd.f32 %v970, %v1026
      %v1028 = vpop.f32.mrb[0].mxu0
      %1029 = vdwg.mxu0
      %v1030 = vld [vmem:[%s6] sm:$0x1]
      %v1031 = vld [vmem:[%s7] sm:$0x1]
      %v1033 = vlaneseq
      %v1034 = vshrl.u32 %v1033, 7
      %v1035 = vsub.s32 0, %v1034
      %v1036 = vrot.slane %v1030, %v1035
      %v1038 = vmul.f32 %v1036, %v1024
      %v1039 = vmul.f32 %v1036, %v1027
      %v1040 = vand.u32 2147483647, %v1038
      %vm1041 = vcmp.le.f32.partialorder %v1040, 0.7853982
      %vm1042 = vcmp.lt.s32.totalorder %v1038, 0
      %v1043 = vand.u32 %v1038, 2139095040
      %v1044 = vshrl.u32 %v1043, 23
      %v1045 = vsub.s32 %v1044, 127
      %v1046 = vand.u32 2147483647, %v1038
      %v1047 = vand.u32 %v1046, 8388607
      %v1048 = vor.u32 %v1047, 8388608
      %v1049 = vsub.s32 0, %v1048
      %v1050 = vadd.s32 %v1045, 1
      %vm1051 = vcmp.gt.s32.totalorder %v1050, 0
      %v1052 = vsel %vm1051, %v1050, 0
      %v1053 = vshrl.u32 %v1052, 5
      %v1054 = vand.u32 %v1052, 31
      %v1055 = vsub.s32 32, %v1054
      %v1056 = vshrl.u32 683565275, %v1055
      %v1057 = vshll.u32 683565275, %v1054
      %v1058 = vshrl.u32 2475754826, %v1055
      %v1059 = vor.u32 %v1057, %v1058
      %v1060 = vshll.u32 2475754826, %v1054
      %v1061 = vshrl.u32 2131351028, %v1055
      %v1062 = vor.u32 %v1060, %v1061
      %v1063 = vshll.u32 2131351028, %v1054
      %v1064 = vshrl.u32 2102212464, %v1055
      %v1065 = vor.u32 %v1063, %v1064
      %v1066 = vshll.u32 2102212464, %v1054
      %v1067 = vshrl.u32 920167782, %v1055
      %v1068 = vor.u32 %v1066, %v1067
      %v1069 = vshll.u32 920167782, %v1054
      %v1070 = vshrl.u32 1326507024, %v1055
      %v1071 = vor.u32 %v1069, %v1070
      %vm1072 = vcmp.lt.s32.totalorder %v1053, 1
      %vm1073 = vcmp.lt.s32.totalorder %v1053, 2
      %vm1074 = vcmp.lt.s32.totalorder %v1053, 3
      %vm1075 = vcmp.lt.s32.totalorder %v1053, 4
      %v1076 = vsel %vm1072, %v1056, %v1059
      %v1077 = vsel %vm1075, %v1065, 2102212464
      %v1078 = vsel %vm1074, %v1062, %v1077
      %v1079 = vsel %vm1073, %v1076, %v1078
      %v1080 = vsel %vm1072, %v1059, %v1062
      %v1081 = vsel %vm1075, %v1068, 920167782
      %v1082 = vsel %vm1074, %v1065, %v1081
      %v1083 = vsel %vm1073, %v1080, %v1082
      %v1084 = vsel %vm1072, %v1062, %v1065
      %v1085 = vsel %vm1075, %v1071, 1326507024
      %v1086 = vsel %vm1074, %v1068, %v1085
      %v1087 = vsel %vm1073, %v1084, %v1086
      %v1088 = vshll.u32 %v1048, 8
      %v1089 = vmul.u32.u64.compose %v1088, %v1087
      %v1090 = vextract.low.u32 %v1089
      %v1091 = vextract.high.u32 %v1089
      %v1092 = vmul.u32.u64.compose %v1088, %v1083
      %v1093 = vextract.low.u32 %v1092
      %v1094 = vextract.high.u32 %v1092
      %v1095 = vmul.u32 %v1088, %v1079
      %v1096 = vadd.s32 %v1091, %v1093
      %vm1097 = vc.u32 %v1091, %v1093
      %v1098 = vadd.s32 %v1094, 1
      %v1099 = vsel %vm1097, %v1098, %v1094
      %v1100 = vadd.s32 %v1095, %v1099
      %v1101 = vadd.s32 %v1100, 536870912
      %v1102 = vshrl.u32 %v1101, 30
      %v1103 = vshll.u32 %v1102, 30
      %v1104 = vsub.s32 %v1100, %v1103
      %vm1105 = vcmp.lt.s32.totalorder %v1104, 0
      %v1106 = vsub.s32 0, %v1104
      %v1107 = vsel %vm1105, %v1106, %v1104
      %v1108 = vclz %v1107
      %v1109 = vsub.s32 %v1108, 2
      %vm1110 = vcmp.gt.s32.totalorder 0, %v1109
      %v1111 = vsel %vm1110, 0, %v1109
      %v1112 = vsub.s32 32, %v1111
      %v1113 = vshll.u32 %v1104, %v1111
      %v1114 = vshrl.u32 %v1096, %v1112
      %v1115 = vor.u32 %v1113, %v1114
      %v1116 = vsub.s32 4294967266, %v1111
      %v1117 = vadd.s32 %v1116, 127
      %v1118 = vshll.u32 %v1117, 23
      %v1119 = vor.u32 4788187, %v1118
      %v1120 = vand.u32 2147483647, %v1119
      %v1122 = vcvt.s32.f32 %v1115
      %v1123 = vmul.f32 %v1122, %v1120
      %v1124 = vxor.u32 %v1123, 2147483648
      %v1125 = vsel %vm1042, %v1124, %v1123
      %v1126 = vsub.s32 4, %v1102
      %v1127 = vsel %vm1042, %v1126, %v1102
      %v1128 = vsel %vm1041, %v1038, %v1125
      %v1129 = vsel %vm1041, 0, %v1127
      %v1130 = vcosq.f32.pop %v1128
      %v1131 = vsinq.f32.pop %v1128
      %vm1132 = vweird.f32 %v1038
      %v1133 = vadd.s32 %v1129, 3
      %v1134 = vand.u32 %v1133, 3
      %vm1135 = vcmp.lt.s32.totalorder %v1134, 2
      %vm1136 = vcmp.eq.s32.totalorder %v1134, 0
      %v1137 = vxor.u32 %v1131, 2147483648
      %v1138 = vsel %vm1136, %v1130, %v1137
      %vm1139 = vcmp.eq.s32.totalorder %v1134, 2
      %v1140 = vxor.u32 %v1130, 2147483648
      %v1141 = vsel %vm1139, %v1140, %v1131
      %v1142 = vsel %vm1135, %v1138, %v1141
      %v1143 = vsel %vm1132, nan, %v1142
      %v1144 = vand.u32 2147483647, %v1039
      %vm1145 = vcmp.le.f32.partialorder %v1144, 0.7853982
      %vm1146 = vcmp.lt.s32.totalorder %v1039, 0
      %v1147 = vand.u32 %v1039, 2139095040
      %v1148 = vshrl.u32 %v1147, 23
      %v1149 = vsub.s32 %v1148, 127
      %v1150 = vand.u32 2147483647, %v1039
      %v1151 = vand.u32 %v1150, 8388607
      %v1152 = vor.u32 %v1151, 8388608
      %v1153 = vsub.s32 0, %v1152
      %v1154 = vadd.s32 %v1149, 1
      %vm1155 = vcmp.gt.s32.totalorder %v1154, 0
      %v1156 = vsel %vm1155, %v1154, 0
      %v1157 = vshrl.u32 %v1156, 5
      %v1158 = vand.u32 %v1156, 31
      %v1159 = vsub.s32 32, %v1158
      %v1160 = vshrl.u32 683565275, %v1159
      %v1161 = vshll.u32 683565275, %v1158
      %v1162 = vshrl.u32 2475754826, %v1159
      %v1163 = vor.u32 %v1161, %v1162
      %v1164 = vshll.u32 2475754826, %v1158
      %v1165 = vshrl.u32 2131351028, %v1159
      %v1166 = vor.u32 %v1164, %v1165
      %v1167 = vshll.u32 2131351028, %v1158
      %v1168 = vshrl.u32 2102212464, %v1159
      %v1169 = vor.u32 %v1167, %v1168
      %v1170 = vshll.u32 2102212464, %v1158
      %v1171 = vshrl.u32 920167782, %v1159
      %v1172 = vor.u32 %v1170, %v1171
      %v1173 = vshll.u32 920167782, %v1158
      %v1174 = vshrl.u32 1326507024, %v1159
      %v1175 = vor.u32 %v1173, %v1174
      %vm1176 = vcmp.lt.s32.totalorder %v1157, 1
      %vm1177 = vcmp.lt.s32.totalorder %v1157, 2
      %vm1178 = vcmp.lt.s32.totalorder %v1157, 3
      %vm1179 = vcmp.lt.s32.totalorder %v1157, 4
      %v1180 = vsel %vm1176, %v1160, %v1163
      %v1181 = vsel %vm1179, %v1169, 2102212464
      %v1182 = vsel %vm1178, %v1166, %v1181
      %v1183 = vsel %vm1177, %v1180, %v1182
      %v1184 = vsel %vm1176, %v1163, %v1166
      %v1185 = vsel %vm1179, %v1172, 920167782
      %v1186 = vsel %vm1178, %v1169, %v1185
      %v1187 = vsel %vm1177, %v1184, %v1186
      %v1188 = vsel %vm1176, %v1166, %v1169
      %v1189 = vsel %vm1179, %v1175, 1326507024
      %v1190 = vsel %vm1178, %v1172, %v1189
      %v1191 = vsel %vm1177, %v1188, %v1190
      %v1192 = vshll.u32 %v1152, 8
      %v1193 = vmul.u32.u64.compose %v1192, %v1191
      %v1194 = vextract.low.u32 %v1193
      %v1195 = vextract.high.u32 %v1193
      %v1196 = vmul.u32.u64.compose %v1192, %v1187
      %v1197 = vextract.low.u32 %v1196
      %v1198 = vextract.high.u32 %v1196
      %v1199 = vmul.u32 %v1192, %v1183
      %v1200 = vadd.s32 %v1195, %v1197
      %vm1201 = vc.u32 %v1195, %v1197
      %v1202 = vadd.s32 %v1198, 1
      %v1203 = vsel %vm1201, %v1202, %v1198
      %v1204 = vadd.s32 %v1199, %v1203
      %v1205 = vadd.s32 %v1204, 536870912
      %v1206 = vshrl.u32 %v1205, 30
      %v1207 = vshll.u32 %v1206, 30
      %v1208 = vsub.s32 %v1204, %v1207
      %vm1209 = vcmp.lt.s32.totalorder %v1208, 0
      %v1210 = vsub.s32 0, %v1208
      %v1211 = vsel %vm1209, %v1210, %v1208
      %v1212 = vclz %v1211
      %v1213 = vsub.s32 %v1212, 2
      %vm1214 = vcmp.gt.s32.totalorder 0, %v1213
      %v1215 = vsel %vm1214, 0, %v1213
      %v1216 = vsub.s32 32, %v1215
      %v1217 = vshll.u32 %v1208, %v1215
      %v1218 = vshrl.u32 %v1200, %v1216
      %v1219 = vor.u32 %v1217, %v1218
      %v1220 = vsub.s32 4294967266, %v1215
      %v1221 = vadd.s32 %v1220, 127
      %v1222 = vshll.u32 %v1221, 23
      %v1223 = vor.u32 4788187, %v1222
      %v1224 = vand.u32 2147483647, %v1223
      %v1226 = vcvt.s32.f32 %v1219
      %v1227 = vmul.f32 %v1226, %v1224
      %v1228 = vxor.u32 %v1227, 2147483648
      %v1229 = vsel %vm1146, %v1228, %v1227
      %v1230 = vsub.s32 4, %v1206
      %v1231 = vsel %vm1146, %v1230, %v1206
      %v1232 = vsel %vm1145, %v1039, %v1229
      %v1233 = vsel %vm1145, 0, %v1231
      %v1234 = vcosq.f32.pop %v1232
      %v1235 = vsinq.f32.pop %v1232
      %vm1236 = vweird.f32 %v1039
      %v1237 = vadd.s32 %v1233, 3
      %v1238 = vand.u32 %v1237, 3
      %vm1239 = vcmp.lt.s32.totalorder %v1238, 2
      %vm1240 = vcmp.eq.s32.totalorder %v1238, 0
      %v1241 = vxor.u32 %v1235, 2147483648
      %v1242 = vsel %vm1240, %v1234, %v1241
      %vm1243 = vcmp.eq.s32.totalorder %v1238, 2
      %v1244 = vxor.u32 %v1234, 2147483648
      %v1245 = vsel %vm1243, %v1244, %v1235
      %v1246 = vsel %vm1239, %v1242, %v1245
      %v1247 = vsel %vm1236, nan, %v1246
      %v1248 = vmul.f32 %v1143, %v1143
      %v1249 = vmul.f32 %v1247, %v1247
      %v1251 = vlaneseq
      %v1252 = vshrl.u32 %v1251, 7
      %v1253 = vsub.s32 0, %v1252
      %v1254 = vrot.slane %v1031, %v1253
      %v1256 = vmul.f32 %v1254, %v1248
      %v1257 = vmul.f32 %v1254, %v1249
      %v1258 = vadd.f32 %v1024, %v1256
      %v1259 = vadd.f32 %v1027, %v1257
      %v1260 = vpack.c.bf16 %v1259, %v1258
      %v1261 = vld [vmem:[%s8] sm:$0xf]
      %v1262 = vld [vmem:[%s9] sm:$0x1]
      %v1264 = vlaneseq
      %v1265 = vshrl.u32 %v1264, 7
      %v1266 = vsub.s32 0, %v1265
      %v1267 = vrot.slane %v1262, %v1266
      %v1270 = vsel %vm692, %v1260, 0
      %v1273 = vsel %vm985, %v1261, 0
      %1275 = vmatprep.subr.bf16.mxu0 0
      %1276 = vmatpush1.bf16.msra.mxu0 %v1273
      %1277 = vmatprep.subr.bf16.mxu0 0
      %1278 = vmatpush1.bf16.msra.mxu0 0
      %1279 = vmatprep.subr.bf16.mxu0 0
      %1280 = vmatpush1.bf16.msra.mxu0 0
      %1281 = vmatprep.subr.bf16.mxu0 0
      %1282 = vmatpush1.bf16.msra.mxu0 0
      %1283 = vmatprep.subr.bf16.mxu0 0
      %1284 = vmatpush1.bf16.msra.mxu0 0
      %1285 = vmatprep.subr.bf16.mxu0 0
      %1286 = vmatpush1.bf16.msra.mxu0 0
      %1287 = vmatprep.subr.bf16.mxu0 0
      %1288 = vmatpush1.bf16.msra.mxu0 0
      %1289 = vmatprep.subr.bf16.mxu0 0
      %1290 = vmatpush1.bf16.msra.mxu0 0
      %1291 = vmatprep.subr.bf16.mxu0 0
      %1292 = vmatpush1.bf16.msra.mxu0 0
      %1293 = vmatprep.subr.bf16.mxu0 0
      %1294 = vmatpush1.bf16.msra.mxu0 0
      %1295 = vmatprep.subr.bf16.mxu0 0
      %1296 = vmatpush1.bf16.msra.mxu0 0
      %1297 = vmatprep.subr.bf16.mxu0 0
      %1298 = vmatpush1.bf16.msra.mxu0 0
      %1299 = vmatprep.subr.bf16.mxu0 0
      %1300 = vmatpush1.bf16.msra.mxu0 0
      %1301 = vmatprep.subr.bf16.mxu0 0
      %1302 = vmatpush1.bf16.msra.mxu0 0
      %1303 = vmatprep.subr.bf16.mxu0 0
      %1304 = vmatpush1.bf16.msra.mxu0 0
      %1305 = vmatprep.subr.bf16.mxu0 0
      %1306 = vmatpush1.bf16.msra.mxu0 0
      %1307 = vmatprep.mubr.bf16.mxu0 0
      %1308 = vmatmul.mubr.bf16.gmra.mrb[0].mxu0 %v1270
      %v1309 = vpop.f32.mrb[0].mxu0
      %v1310 = vadd.f32 %v1267, %v1309
      %v1311 = vpop.f32.mrb[0].mxu0
      %v1312 = vpop.f32.mrb[0].mxu0
      %v1313 = vadd.f32 %v1267, %v1312
      %v1314 = vpop.f32.mrb[0].mxu0
      %1315 = vdwg.mxu0
      %v1316 = vld [vmem:[%s444] sm:$0xf]
      %v1317 = vld [vmem:[%s444 + $0x4] sm:$0xf]
      %v1318 = vunpack.c.l.bf16 %v1316
      %v1319 = vunpack.c.l.bf16 %v1317
      %v1320 = vadd.f32 %v1310, %v1318
      %v1321 = vadd.f32 %v1313, %v1319
      %v1322 = vpack.c.bf16 %v1321, %v1320
      %v1324 = vunpack.c.l.b16 %v1322
      %v1325 = vunpack.c.h.b16 %v1322
      %v1326 = vpack.c.b16 %v1324, %v1324
      %v1327 = vpack.c.b16 %v1325, %v1325
      %vm1330 = vcmask 60416
      %1331 = vst.msk [vmem:[%s454] sm:$0xf] %vm1330, %v1326
      %1332 = vst.msk [vmem:[%s454 + $0x4] sm:$0xf] %vm1330, %v1327
      %s1333 = smul.u32 2, %s26
      %p1334 = scmp.lt.s32.totalorder %s25, 1
      %s1335 = scalar_select %p1334, %s25, 1
      %p1336 = scmp.lt.s32.totalorder %s1333, 7
      %s1337 = scalar_select %p1336, %s1333, 7
      %s1338 = smul.addr %s1335, 8
      %s1339 = sadd.s32 %s1337, %s1338
      %s1340 = smul.addr %s1339, 4
      %s1341 = scalar_lea.vmem %s10, %s1340
      // Predicated region
      $region69: #{tpu_custom_call.1} parent=59 // pred_check
        %p1342 = pneg %p283
      $region70: #{tpu_custom_call.1} parent=59 // pred_check_branch
        %1344 = sbr.rel (%p1342) target = $region72
      $region71: #{tpu_custom_call.1} parent=59 // pred_region
        %s1345 = smul.u32 2, %s26
      $region72: #{tpu_custom_call.1} parent=59 // pred_fallthru
        _
    $region60: #{tpu_custom_call.1} parent=5 // pred_fallthru
      _
    %p1346 = scmp.le.s32.totalorder 2, %s16
    // Predicated region
    $region73: #{tpu_custom_call.1} parent=5 // pred_check
      %p1347 = pneg %p1346
    $region74: #{tpu_custom_call.1} parent=5 // pred_check_branch
      %1349 = sbr.rel (%p1347) target = $region76
    $region75: #{tpu_custom_call.1} parent=5 // pred_region
      %s1350 = ssub.s32 %s16, 2
      // Predicated region
      $region77: #{tpu_custom_call.1} parent=75 // pred_check
        %p1351 = pneg %p289
      $region78: #{tpu_custom_call.1} parent=75 // pred_check_branch
        %1353 = sbr.rel (%p1351) target = $region80
      $region79: #{tpu_custom_call.1} parent=75 // pred_region
        %s1354 = smul.u32 2, %s28
        %p1355 = scmp.lt.s32.totalorder %s27, 1
        %s1356 = scalar_select %p1355, %s27, 1
        %p1357 = scmp.lt.s32.totalorder %s1354, 7
        %s1358 = scalar_select %p1357, %s1354, 7
        %s1359 = smul.addr %s1356, 8
        %s1360 = sadd.s32 %s1358, %s1359
        %s1361 = smul.addr %s1360, 4
        %s1362 = scalar_lea.vmem %s10, %s1361
      $region80: #{tpu_custom_call.1} parent=75 // pred_fallthru
        _
    $region76: #{tpu_custom_call.1} parent=5 // pred_fallthru
      _
  $region6: #{tpu_custom_call.1} parent=0 // loop_footer
    %s20 = sadd.s32 1, %s16
  $region7: #{tpu_custom_call.1} parent=0 // loop_footer_branch
    %15 = sbr.rel target = $region3
  $region8: #{tpu_custom_call.1} parent=0 // loop_exit
    _

</llo_original>
